<compile_context>
chip_gen: v7x
topology: tpu7x:2x2x1
jax: 0.10.0
libtpu: 0.0.40
codegen_flags: <defaults>
</compile_context>

<pallas_src>
import math
import functools

import jax
import jax.numpy as jnp
from jax import lax
from jax.experimental import pallas as pl
from jax.experimental.pallas import tpu as pltpu

_EPS = 1.1920928955078125e-07  # torch.finfo(torch.float32).eps
_NEG = -1e30


def _cos_norm(x, axis=-1):
    n = jnp.sqrt(jnp.sum(x * x, axis=axis, keepdims=True))
    return x / (n + _EPS)


# -----------------------------------------------------------------------------
# Fused kernel: lambdas-mix + causal self-attention + nGPT residual + MLP +
# nGPT residual.  One grid step per batch element.
# -----------------------------------------------------------------------------
def _nblock_attn_mlp_kernel(lambdas_ref, attn_lam_ref,            # SMEM (2,)
                            x_ref, x0_ref, ve_ref,                 # VMEM (1,T,D) f32
                            wqkv_ref, wo_ref,                      # VMEM (D,3D)/(D,D) bf16
                            w_fc_ref, w_proj_ref,                  # VMEM (D,4D)/(4D,D) bf16
                            attn_alpha_ref, mlp_alpha_ref,         # VMEM (1,D) f32
                            out_ref,                               # VMEM (1,T,D) f32
                            *, num_heads, head_dim, dim, attn_scale,
                            lr_attn_const, lr_mlp_const, seq_len):
    T, D = seq_len, dim
    H, hd = num_heads, head_dim

    # x = lambdas[0] * x + lambdas[1] * x0
    x = lambdas_ref[0] * x_ref[0] + lambdas_ref[1] * x0_ref[0]          # (T, D) f32

    # ---- single fused QKV projection (bf16 inputs, f32 accumulate) ----
    xb = x.astype(jnp.bfloat16)
    qkv = jnp.dot(xb, wqkv_ref[...], preferred_element_type=jnp.float32)  # (T, 3D)
    q = qkv[:, :D]
    k = qkv[:, D:2 * D]
    # value-embedding mix, elementwise on the full (T, D) slab
    v = attn_lam_ref[0] * qkv[:, 2 * D:] + attn_lam_ref[1] * ve_ref[0]
    vb = v.astype(jnp.bfloat16)

    # ---- causal mask ----
    row = lax.broadcasted_iota(jnp.int32, (T, T), 0)
    col = lax.broadcasted_iota(jnp.int32, (T, T), 1)
    causal = row >= col

    # ---- per-head attention (static unroll; scores/p die each iteration) ----
    ys = []
    for h in range(H):
        lo = h * hd
        q_h = _cos_norm(q[:, lo:lo + hd])                                 # (T, hd)
        k_h = _cos_norm(k[:, lo:lo + hd])
        s = lax.dot_general(q_h.astype(jnp.bfloat16), k_h.astype(jnp.bfloat16),
                            (((1,), (1,)), ((), ())),
                            preferred_element_type=jnp.float32)           # (T, T)
        s = s * attn_scale
        s = jnp.where(causal, s, _NEG)
        s = s - jnp.max(s, axis=-1, keepdims=True)
        p = jnp.exp(s)
        p = p * pl.reciprocal(jnp.sum(p, axis=-1, keepdims=True), approx=True)
        ys.append(jnp.dot(p.astype(jnp.bfloat16), vb[:, lo:lo + hd],
                          preferred_element_type=jnp.float32))            # (T, hd)
    y = jnp.concatenate(ys, axis=-1)                                      # (T, D)

    # ---- output projection + nGPT residual ----
    attn_out = jnp.dot(y.astype(jnp.bfloat16), wo_ref[...],
                       preferred_element_type=jnp.float32)                # (T, D)
    x_a = _cos_norm(attn_out)
    lr_attn = jnp.abs(attn_alpha_ref[...] * lr_attn_const)                # (1, D)
    x = _cos_norm(x + lr_attn * (x_a - x))

    # ---- MLP (relu^2) + nGPT residual ----
    hidden = jnp.dot(x.astype(jnp.bfloat16), w_fc_ref[...],
                     preferred_element_type=jnp.float32)                  # (T, 4D)
    hidden = jnp.maximum(hidden, 0.0)
    hidden = hidden * hidden
    m = jnp.dot(hidden.astype(jnp.bfloat16), w_proj_ref[...],
                preferred_element_type=jnp.float32)                       # (T, D)
    h_m = _cos_norm(m)
    lr_mlp = jnp.abs(mlp_alpha_ref[...] * lr_mlp_const)                   # (1, D)
    out_ref[0] = _cos_norm(x + lr_mlp * (h_m - x))


# -----------------------------------------------------------------------------
# Fused kernel for layer_idx == 7 (attn is None): lambdas-mix + MLP + residual.
# -----------------------------------------------------------------------------
def _nblock_mlp_only_kernel(lambdas_ref, x_ref, x0_ref,
                            w_fc_ref, w_proj_ref, mlp_alpha_ref, out_ref,
                            *, lr_mlp_const):
    x = lambdas_ref[0] * x_ref[0] + lambdas_ref[1] * x0_ref[0]            # (T, D)
    hidden = jnp.dot(x.astype(jnp.bfloat16), w_fc_ref[...],
                     preferred_element_type=jnp.float32)                  # (T, 4D)
    hidden = jnp.maximum(hidden, 0.0)
    hidden = hidden * hidden
    m = jnp.dot(hidden.astype(jnp.bfloat16), w_proj_ref[...],
                preferred_element_type=jnp.float32)                       # (T, D)
    h_m = _cos_norm(m)
    lr_mlp = jnp.abs(mlp_alpha_ref[...] * lr_mlp_const)
    out_ref[0] = _cos_norm(x + lr_mlp * (h_m - x))


# -----------------------------------------------------------------------------
# Wrapper module (plain JAX glue: parameter setup, pallas_call).
# -----------------------------------------------------------------------------
class NBlockPallas:
    def __init__(self, dim, num_heads, layer_idx, n_layers=None, key=None):
        assert dim % num_heads == 0
        self.dim = dim
        self.num_heads = num_heads
        self.head_dim = dim // num_heads
        self.layer_idx = layer_idx
        self.has_attn = layer_idx != 7
        self.attn_scale = math.sqrt(dim)

        base_scale = 1.0 / math.sqrt(dim)
        self.attn_alpha_init_value = 0.05 if n_layers is None else 1.0 / n_layers
        self.attn_alpha_init_scaling = base_scale
        self.mlp_alpha_init_value = 0.05 if n_layers is None else 1.0 / n_layers
        self.mlp_alpha_init_scaling = base_scale

        key = jax.random.PRNGKey(0) if key is None else key
        ks = jax.random.split(key, 6)
        s = 0.02
        hdim = 4 * dim
        # weights in bf16 (MXU-rate + halved DMA/VMEM); scalars/alphas in f32.
        # Q/K/V stacked column-wise into one (D, 3D) matrix for a single matmul.
        wq = (s * jax.random.normal(ks[0], (dim, dim))).astype(jnp.bfloat16)
        wk = (s * jax.random.normal(ks[1], (dim, dim))).astype(jnp.bfloat16)
        wv = (s * jax.random.normal(ks[2], (dim, dim))).astype(jnp.bfloat16)
        self.params = dict(
            lambdas=jnp.array([1.0, 0.0], jnp.float32),
            attn_lambdas=jnp.array([0.5, 0.5], jnp.float32),
            attn_alpha=self.attn_alpha_init_scaling
                       * jnp.ones((dim,), jnp.float32),
            mlp_alpha=self.mlp_alpha_init_scaling
                      * jnp.ones((dim,), jnp.float32),
            wqkv=jnp.concatenate([wq, wk, wv], axis=1),                   # (D, 3D)
            wo=(s * jax.random.normal(ks[3], (dim, dim))).astype(jnp.bfloat16),
            w_fc=(s * jax.random.normal(ks[4], (dim, hdim))).astype(jnp.bfloat16),
            w_proj=(s * jax.random.normal(ks[5], (hdim, dim))).astype(jnp.bfloat16),
        )

    def __call__(self, x, ve, x0, block_mask=None):
        B, T, D = x.shape
        p = self.params
        smem = pl.BlockSpec(memory_space=pltpu.MemorySpace.SMEM)
        act = pl.BlockSpec((1, T, D), lambda b: (b, 0, 0))
        vec = pl.BlockSpec((1, D), lambda b: (0, 0))
        w_qkv_spec = pl.BlockSpec((D, 3 * D), lambda b: (0, 0))
        w_dd = pl.BlockSpec((D, D), lambda b: (0, 0))
        w_fc_spec = pl.BlockSpec((D, 4 * D), lambda b: (0, 0))
        w_pr_spec = pl.BlockSpec((4 * D, D), lambda b: (0, 0))
        cparams = pltpu.CompilerParams(dimension_semantics=("parallel",))

        lr_mlp_const = self.mlp_alpha_init_value / self.mlp_alpha_init_scaling

        if self.has_attn:
            lr_attn_const = self.attn_alpha_init_value / self.attn_alpha_init_scaling
            kern = functools.partial(
                _nblock_attn_mlp_kernel,
                num_heads=self.num_heads, head_dim=self.head_dim, dim=D,
                attn_scale=self.attn_scale,
                lr_attn_const=lr_attn_const, lr_mlp_const=lr_mlp_const,
                seq_len=T)
            return pl.pallas_call(
                kern,
                out_shape=jax.ShapeDtypeStruct((B, T, D), jnp.float32),
                grid=(B,),
                in_specs=[smem, smem,                       # lambdas, attn_lambdas
                          act, act, act,                    # x, x0, ve
                          w_qkv_spec, w_dd,                 # wqkv, wo
                          w_fc_spec, w_pr_spec,             # w_fc, w_proj
                          vec, vec],                        # attn_alpha, mlp_alpha
                out_specs=pl.BlockSpec((1, T, D), lambda b: (b, 0, 0)),
                compiler_params=cparams,
            )(p["lambdas"], p["attn_lambdas"], x, x0, ve,
              p["wqkv"], p["wo"],
              p["w_fc"], p["w_proj"],
              p["attn_alpha"].reshape(1, D), p["mlp_alpha"].reshape(1, D))
        else:
            kern = functools.partial(_nblock_mlp_only_kernel,
                                     lr_mlp_const=lr_mlp_const)
            return pl.pallas_call(
                kern,
                out_shape=jax.ShapeDtypeStruct((B, T, D), jnp.float32),
                grid=(B,),
                in_specs=[smem, act, act, w_fc_spec, w_pr_spec, vec],
                out_specs=pl.BlockSpec((1, T, D), lambda b: (b, 0, 0)),
                compiler_params=cparams,
            )(p["lambdas"], x, x0, p["w_fc"], p["w_proj"],
              p["mlp_alpha"].reshape(1, D))

    # pure-JAX reference with the same bf16-input / f32-accumulate matmuls.
    def reference(self, x, ve, x0):
        p = self.params
        B, T, D = x.shape
        H, hd = self.num_heads, self.head_dim

        def mm(a, w):
            return jnp.dot(a.astype(jnp.bfloat16), w,
                           preferred_element_type=jnp.float32)

        x = p["lambdas"][0] * x + p["lambdas"][1] * x0
        if self.has_attn:
            wq = p["wqkv"][:, :D]
            wk = p["wqkv"][:, D:2 * D]
            wv = p["wqkv"][:, 2 * D:]
            q = mm(x, wq).reshape(B, T, H, hd)
            k = mm(x, wk).reshape(B, T, H, hd)
            v = mm(x, wv).reshape(B, T, H, hd)
            q, k = _cos_norm(q), _cos_norm(k)
            v = (p["attn_lambdas"][0] * v
                 + p["attn_lambdas"][1] * ve.reshape(B, T, H, hd))
            s = jnp.einsum("bqhd,bkhd->bhqk",
                           q.astype(jnp.bfloat16), k.astype(jnp.bfloat16),
                           preferred_element_type=jnp.float32) * self.attn_scale
            mask = jnp.tril(jnp.ones((T, T), bool))
            s = jnp.where(mask, s, _NEG)
            pattn = jax.nn.softmax(s, axis=-1)
            y = jnp.einsum("bhqk,bkhd->bqhd",
                           pattn.astype(jnp.bfloat16), v.astype(jnp.bfloat16),
                           preferred_element_type=jnp.float32).reshape(B, T, D)
            attn_out = mm(y, p["wo"])
            x_a = _cos_norm(attn_out)
            lr_a = jnp.abs(p["attn_alpha"]
                           * (self.attn_alpha_init_value
                              / self.attn_alpha_init_scaling))
            x = _cos_norm(x + lr_a * (x_a - x))
        h = mm(jnp.square(jnp.maximum(mm(x, p["w_fc"]), 0.0)), p["w_proj"])
        h_m = _cos_norm(h)
        lr_m = jnp.abs(p["mlp_alpha"]
                       * (self.mlp_alpha_init_value / self.mlp_alpha_init_scaling))
        return _cos_norm(x + lr_m * (h_m - x))


if __name__ == "__main__":
    B, T, DIM, HEADS = 2, 16, 128, 4     # lane-dense demo: D multiple of 128
    key = jax.random.PRNGKey(0)
    kx, kv, k0, kp = jax.random.split(key, 4)
    x = jax.random.normal(kx, (B, T, DIM), jnp.float32)
    ve = jax.random.normal(kv, (B, T, DIM), jnp.float32)
    x0 = jax.random.normal(k0, (B, T, DIM), jnp.float32)

    ok = True

    # layer with attention
    block = NBlockPallas(dim=DIM, num_heads=HEADS, layer_idx=0, key=kp)
    y = jax.block_until_ready(block(x, ve, x0, block_mask=None))
    y_ref = block.reference(x, ve, x0)
    ok &= (y.shape == (B, T, DIM))
    ok &= bool(jnp.all(jnp.isfinite(y)))
    ok &= bool(jnp.allclose(y, y_ref, atol=2e-3, rtol=2e-3))

    # layer 7 (no attention)
    block7 = NBlockPallas(dim=DIM, num_heads=HEADS, layer_idx=7, key=kp)
    y7 = jax.block_until_ready(block7(x, ve, x0, block_mask=None))
    y7_ref = block7.reference(x, ve, x0)
    ok &= bool(jnp.all(jnp.isfinite(y7)))
    ok &= bool(jnp.allclose(y7, y7_ref, atol=2e-3, rtol=2e-3))

    assert ok
    print("KERNEL_OK")
</pallas_src>

<mosaic_0001>
module attributes {stable_mosaic.version = 11 : i64} {
  func.func @_nblock_attn_mlp_kernel(%arg0: i32, %arg1: memref<2xf32, #tpu.memory_space<smem>>, %arg2: memref<2xf32, #tpu.memory_space<smem>>, %arg3: memref<1x16x128xf32, #tpu.memory_space<vmem>>, %arg4: memref<1x16x128xf32, #tpu.memory_space<vmem>>, %arg5: memref<1x16x128xf32, #tpu.memory_space<vmem>>, %arg6: memref<128x384xbf16, #tpu.memory_space<vmem>>, %arg7: memref<128x128xbf16, #tpu.memory_space<vmem>>, %arg8: memref<128x512xbf16, #tpu.memory_space<vmem>>, %arg9: memref<512x128xbf16, #tpu.memory_space<vmem>>, %arg10: memref<1x128xf32, #tpu.memory_space<vmem>>, %arg11: memref<1x128xf32, #tpu.memory_space<vmem>>, %arg12: memref<1x16x128xf32, #tpu.memory_space<vmem>>) attributes {dimension_semantics = [#tpu.dimension_semantics<parallel>], iteration_bounds = array<i64: 2>, scalar_prefetch = 0 : i64, scratch_operands = 0 : i64, tpu.core_type = #tpu.core_type<tc>, window_params = [{transform_indices = @transform_0, window_bounds = array<i64: 2>}, {transform_indices = @transform_1, window_bounds = array<i64: 2>}, {transform_indices = @transform_2, window_bounds = array<i64: 1, 16, 128>}, {transform_indices = @transform_3, window_bounds = array<i64: 1, 16, 128>}, {transform_indices = @transform_4, window_bounds = array<i64: 1, 16, 128>}, {pipeline_mode = #tpu.pipeline_mode<synchronous>, transform_indices = @transform_5, window_bounds = array<i64: 128, 384>}, {pipeline_mode = #tpu.pipeline_mode<synchronous>, transform_indices = @transform_6, window_bounds = array<i64: 128, 128>}, {pipeline_mode = #tpu.pipeline_mode<synchronous>, transform_indices = @transform_7, window_bounds = array<i64: 128, 512>}, {pipeline_mode = #tpu.pipeline_mode<synchronous>, transform_indices = @transform_8, window_bounds = array<i64: 512, 128>}, {pipeline_mode = #tpu.pipeline_mode<synchronous>, transform_indices = @transform_9, window_bounds = array<i64: 1, 128>}, {pipeline_mode = #tpu.pipeline_mode<synchronous>, transform_indices = @transform_10, window_bounds = array<i64: 1, 128>}, {transform_indices = @transform_11, window_bounds = array<i64: 1, 16, 128>}]} {
    %c0 = arith.constant 0 : index
    %0 = memref.load %arg1[%c0] : memref<2xf32, #tpu.memory_space<smem>>
    %c0_0 = arith.constant 0 : index
    %c0_1 = arith.constant 0 : index
    %c0_2 = arith.constant 0 : index
    %1 = vector.load %arg3[%c0_0, %c0_1, %c0_2] : memref<1x16x128xf32, #tpu.memory_space<vmem>>, vector<1x16x128xf32>
    %2 = vector.shape_cast %1 : vector<1x16x128xf32> to vector<16x128xf32>
    %3 = vector.broadcast %0 : f32 to vector<16x128xf32>
    %4 = arith.mulf %3, %2 : vector<16x128xf32>
    %c1 = arith.constant 1 : index
    %5 = memref.load %arg1[%c1] : memref<2xf32, #tpu.memory_space<smem>>
    %c0_3 = arith.constant 0 : index
    %c0_4 = arith.constant 0 : index
    %c0_5 = arith.constant 0 : index
    %6 = vector.load %arg4[%c0_3, %c0_4, %c0_5] : memref<1x16x128xf32, #tpu.memory_space<vmem>>, vector<1x16x128xf32>
    %7 = vector.shape_cast %6 : vector<1x16x128xf32> to vector<16x128xf32>
    %8 = vector.broadcast %5 : f32 to vector<16x128xf32>
    %9 = arith.mulf %8, %7 : vector<16x128xf32>
    %10 = arith.addf %4, %9 : vector<16x128xf32>
    %11 = arith.truncf %10 : vector<16x128xf32> to vector<16x128xbf16>
    %c0_6 = arith.constant 0 : index
    %c0_7 = arith.constant 0 : index
    %12 = vector.load %arg6[%c0_6, %c0_7] : memref<128x384xbf16, #tpu.memory_space<vmem>>, vector<128x384xbf16>
    %cst = arith.constant dense<0.000000e+00> : vector<16x384xf32>
    %13 = tpu.matmul %11, %12, %cst {dimension_numbers = #tpu.dot_dimension_numbers<[1], [0], [0], [1], [0, 0, 1, 1], [], []>} : vector<16x128xbf16>, vector<128x384xbf16>, vector<16x384xf32> -> vector<16x384xf32>
    %14 = vector.extract_strided_slice %13 {offsets = [0, 0], sizes = [16, 128], strides = [1, 1]} : vector<16x384xf32> to vector<16x128xf32>
    %15 = vector.extract_strided_slice %13 {offsets = [0, 128], sizes = [16, 128], strides = [1, 1]} : vector<16x384xf32> to vector<16x128xf32>
    %c0_8 = arith.constant 0 : index
    %16 = memref.load %arg2[%c0_8] : memref<2xf32, #tpu.memory_space<smem>>
    %17 = vector.extract_strided_slice %13 {offsets = [0, 256], sizes = [16, 128], strides = [1, 1]} : vector<16x384xf32> to vector<16x128xf32>
    %18 = vector.broadcast %16 : f32 to vector<16x128xf32>
    %19 = arith.mulf %18, %17 : vector<16x128xf32>
    %c1_9 = arith.constant 1 : index
    %20 = memref.load %arg2[%c1_9] : memref<2xf32, #tpu.memory_space<smem>>
    %c0_10 = arith.constant 0 : index
    %c0_11 = arith.constant 0 : index
    %c0_12 = arith.constant 0 : index
    %21 = vector.load %arg5[%c0_10, %c0_11, %c0_12] : memref<1x16x128xf32, #tpu.memory_space<vmem>>, vector<1x16x128xf32>
    %22 = vector.shape_cast %21 : vector<1x16x128xf32> to vector<16x128xf32>
    %23 = vector.broadcast %20 : f32 to vector<16x128xf32>
    %24 = arith.mulf %23, %22 : vector<16x128xf32>
    %25 = arith.addf %19, %24 : vector<16x128xf32>
    %26 = arith.truncf %25 : vector<16x128xf32> to vector<16x128xbf16>
    %27 = tpu.iota {dimensions = array<i32: 0>} : vector<16x16xi32>
    %28 = tpu.iota {dimensions = array<i32: 1>} : vector<16x16xi32>
    %29 = arith.cmpi sge, %27, %28 : vector<16x16xi32>
    %30 = vector.extract_strided_slice %14 {offsets = [0, 0], sizes = [16, 32], strides = [1, 1]} : vector<16x128xf32> to vector<16x32xf32>
    %31 = arith.mulf %30, %30 : vector<16x32xf32>
    %cst_13 = arith.constant dense<0.000000e+00> : vector<16xf32>
    %32 = vector.multi_reduction <add>, %31, %cst_13 [1] : vector<16x32xf32> to vector<16xf32>
    %33 = vector.shape_cast %32 : vector<16xf32> to vector<16x1xf32>
    %34 = math.sqrt %33 : vector<16x1xf32>
    %cst_14 = arith.constant 1.1920929E-7 : f32
    %35 = vector.broadcast %cst_14 : f32 to vector<16x1xf32>
    %36 = arith.addf %34, %35 : vector<16x1xf32>
    %37 = vector.broadcast %36 : vector<16x1xf32> to vector<16x32xf32>
    %38 = arith.divf %30, %37 : vector<16x32xf32>
    %39 = vector.extract_strided_slice %15 {offsets = [0, 0], sizes = [16, 32], strides = [1, 1]} : vector<16x128xf32> to vector<16x32xf32>
    %40 = arith.mulf %39, %39 : vector<16x32xf32>
    %cst_15 = arith.constant dense<0.000000e+00> : vector<16xf32>
    %41 = vector.multi_reduction <add>, %40, %cst_15 [1] : vector<16x32xf32> to vector<16xf32>
    %42 = vector.shape_cast %41 : vector<16xf32> to vector<16x1xf32>
    %43 = math.sqrt %42 : vector<16x1xf32>
    %cst_16 = arith.constant 1.1920929E-7 : f32
    %44 = vector.broadcast %cst_16 : f32 to vector<16x1xf32>
    %45 = arith.addf %43, %44 : vector<16x1xf32>
    %46 = vector.broadcast %45 : vector<16x1xf32> to vector<16x32xf32>
    %47 = arith.divf %39, %46 : vector<16x32xf32>
    %48 = arith.truncf %38 : vector<16x32xf32> to vector<16x32xbf16>
    %49 = arith.truncf %47 : vector<16x32xf32> to vector<16x32xbf16>
    %cst_17 = arith.constant dense<0.000000e+00> : vector<16x16xf32>
    %50 = tpu.matmul %48, %49, %cst_17 {dimension_numbers = #tpu.dot_dimension_numbers<[1], [1], [0], [0], [0, 0, 1, 0], [], []>} : vector<16x32xbf16>, vector<16x32xbf16>, vector<16x16xf32> -> vector<16x16xf32>
    %cst_18 = arith.constant 11.3137083 : f32
    %51 = vector.broadcast %cst_18 : f32 to vector<16x16xf32>
    %52 = arith.mulf %50, %51 : vector<16x16xf32>
    %cst_19 = arith.constant -1.000000e+30 : f32
    %53 = vector.broadcast %cst_19 : f32 to vector<16x16xf32>
    %54 = arith.select %29, %52, %53 : vector<16x16xi1>, vector<16x16xf32>
    %cst_20 = arith.constant dense<0xFF800000> : vector<16xf32>
    %55 = vector.multi_reduction <maximumf>, %54, %cst_20 [1] : vector<16x16xf32> to vector<16xf32>
    %56 = vector.shape_cast %55 : vector<16xf32> to vector<16x1xf32>
    %57 = vector.broadcast %56 : vector<16x1xf32> to vector<16x16xf32>
    %58 = arith.subf %54, %57 : vector<16x16xf32>
    %59 = math.exp %58 : vector<16x16xf32>
    %cst_21 = arith.constant dense<0.000000e+00> : vector<16xf32>
    %60 = vector.multi_reduction <add>, %59, %cst_21 [1] : vector<16x16xf32> to vector<16xf32>
    %61 = vector.shape_cast %60 : vector<16xf32> to vector<16x1xf32>
    %62 = tpu.reciprocal %61 {approx = true} : vector<16x1xf32> -> vector<16x1xf32>
    %63 = vector.broadcast %62 : vector<16x1xf32> to vector<16x16xf32>
    %64 = arith.mulf %59, %63 : vector<16x16xf32>
    %65 = arith.truncf %64 : vector<16x16xf32> to vector<16x16xbf16>
    %66 = vector.extract_strided_slice %26 {offsets = [0, 0], sizes = [16, 32], strides = [1, 1]} : vector<16x128xbf16> to vector<16x32xbf16>
    %cst_22 = arith.constant dense<0.000000e+00> : vector<16x32xf32>
    %67 = tpu.matmul %65, %66, %cst_22 {dimension_numbers = #tpu.dot_dimension_numbers<[1], [0], [0], [1], [0, 0, 1, 1], [], []>} : vector<16x16xbf16>, vector<16x32xbf16>, vector<16x32xf32> -> vector<16x32xf32>
    %68 = vector.extract_strided_slice %14 {offsets = [0, 32], sizes = [16, 32], strides = [1, 1]} : vector<16x128xf32> to vector<16x32xf32>
    %69 = arith.mulf %68, %68 : vector<16x32xf32>
    %cst_23 = arith.constant dense<0.000000e+00> : vector<16xf32>
    %70 = vector.multi_reduction <add>, %69, %cst_23 [1] : vector<16x32xf32> to vector<16xf32>
    %71 = vector.shape_cast %70 : vector<16xf32> to vector<16x1xf32>
    %72 = math.sqrt %71 : vector<16x1xf32>
    %cst_24 = arith.constant 1.1920929E-7 : f32
    %73 = vector.broadcast %cst_24 : f32 to vector<16x1xf32>
    %74 = arith.addf %72, %73 : vector<16x1xf32>
    %75 = vector.broadcast %74 : vector<16x1xf32> to vector<16x32xf32>
    %76 = arith.divf %68, %75 : vector<16x32xf32>
    %77 = vector.extract_strided_slice %15 {offsets = [0, 32], sizes = [16, 32], strides = [1, 1]} : vector<16x128xf32> to vector<16x32xf32>
    %78 = arith.mulf %77, %77 : vector<16x32xf32>
    %cst_25 = arith.constant dense<0.000000e+00> : vector<16xf32>
    %79 = vector.multi_reduction <add>, %78, %cst_25 [1] : vector<16x32xf32> to vector<16xf32>
    %80 = vector.shape_cast %79 : vector<16xf32> to vector<16x1xf32>
    %81 = math.sqrt %80 : vector<16x1xf32>
    %cst_26 = arith.constant 1.1920929E-7 : f32
    %82 = vector.broadcast %cst_26 : f32 to vector<16x1xf32>
    %83 = arith.addf %81, %82 : vector<16x1xf32>
    %84 = vector.broadcast %83 : vector<16x1xf32> to vector<16x32xf32>
    %85 = arith.divf %77, %84 : vector<16x32xf32>
    %86 = arith.truncf %76 : vector<16x32xf32> to vector<16x32xbf16>
    %87 = arith.truncf %85 : vector<16x32xf32> to vector<16x32xbf16>
    %cst_27 = arith.constant dense<0.000000e+00> : vector<16x16xf32>
    %88 = tpu.matmul %86, %87, %cst_27 {dimension_numbers = #tpu.dot_dimension_numbers<[1], [1], [0], [0], [0, 0, 1, 0], [], []>} : vector<16x32xbf16>, vector<16x32xbf16>, vector<16x16xf32> -> vector<16x16xf32>
    %cst_28 = arith.constant 11.3137083 : f32
    %89 = vector.broadcast %cst_28 : f32 to vector<16x16xf32>
    %90 = arith.mulf %88, %89 : vector<16x16xf32>
    %cst_29 = arith.constant -1.000000e+30 : f32
    %91 = vector.broadcast %cst_29 : f32 to vector<16x16xf32>
    %92 = arith.select %29, %90, %91 : vector<16x16xi1>, vector<16x16xf32>
    %cst_30 = arith.constant dense<0xFF800000> : vector<16xf32>
    %93 = vector.multi_reduction <maximumf>, %92, %cst_30 [1] : vector<16x16xf32> to vector<16xf32>
    %94 = vector.shape_cast %93 : vector<16xf32> to vector<16x1xf32>
    %95 = vector.broadcast %94 : vector<16x1xf32> to vector<16x16xf32>
    %96 = arith.subf %92, %95 : vector<16x16xf32>
    %97 = math.exp %96 : vector<16x16xf32>
    %cst_31 = arith.constant dense<0.000000e+00> : vector<16xf32>
    %98 = vector.multi_reduction <add>, %97, %cst_31 [1] : vector<16x16xf32> to vector<16xf32>
    %99 = vector.shape_cast %98 : vector<16xf32> to vector<16x1xf32>
    %100 = tpu.reciprocal %99 {approx = true} : vector<16x1xf32> -> vector<16x1xf32>
    %101 = vector.broadcast %100 : vector<16x1xf32> to vector<16x16xf32>
    %102 = arith.mulf %97, %101 : vector<16x16xf32>
    %103 = arith.truncf %102 : vector<16x16xf32> to vector<16x16xbf16>
    %104 = vector.extract_strided_slice %26 {offsets = [0, 32], sizes = [16, 32], strides = [1, 1]} : vector<16x128xbf16> to vector<16x32xbf16>
    %cst_32 = arith.constant dense<0.000000e+00> : vector<16x32xf32>
    %105 = tpu.matmul %103, %104, %cst_32 {dimension_numbers = #tpu.dot_dimension_numbers<[1], [0], [0], [1], [0, 0, 1, 1], [], []>} : vector<16x16xbf16>, vector<16x32xbf16>, vector<16x32xf32> -> vector<16x32xf32>
    %106 = vector.extract_strided_slice %14 {offsets = [0, 64], sizes = [16, 32], strides = [1, 1]} : vector<16x128xf32> to vector<16x32xf32>
    %107 = arith.mulf %106, %106 : vector<16x32xf32>
    %cst_33 = arith.constant dense<0.000000e+00> : vector<16xf32>
    %108 = vector.multi_reduction <add>, %107, %cst_33 [1] : vector<16x32xf32> to vector<16xf32>
    %109 = vector.shape_cast %108 : vector<16xf32> to vector<16x1xf32>
    %110 = math.sqrt %109 : vector<16x1xf32>
    %cst_34 = arith.constant 1.1920929E-7 : f32
    %111 = vector.broadcast %cst_34 : f32 to vector<16x1xf32>
    %112 = arith.addf %110, %111 : vector<16x1xf32>
    %113 = vector.broadcast %112 : vector<16x1xf32> to vector<16x32xf32>
    %114 = arith.divf %106, %113 : vector<16x32xf32>
    %115 = vector.extract_strided_slice %15 {offsets = [0, 64], sizes = [16, 32], strides = [1, 1]} : vector<16x128xf32> to vector<16x32xf32>
    %116 = arith.mulf %115, %115 : vector<16x32xf32>
    %cst_35 = arith.constant dense<0.000000e+00> : vector<16xf32>
    %117 = vector.multi_reduction <add>, %116, %cst_35 [1] : vector<16x32xf32> to vector<16xf32>
    %118 = vector.shape_cast %117 : vector<16xf32> to vector<16x1xf32>
    %119 = math.sqrt %118 : vector<16x1xf32>
    %cst_36 = arith.constant 1.1920929E-7 : f32
    %120 = vector.broadcast %cst_36 : f32 to vector<16x1xf32>
    %121 = arith.addf %119, %120 : vector<16x1xf32>
    %122 = vector.broadcast %121 : vector<16x1xf32> to vector<16x32xf32>
    %123 = arith.divf %115, %122 : vector<16x32xf32>
    %124 = arith.truncf %114 : vector<16x32xf32> to vector<16x32xbf16>
    %125 = arith.truncf %123 : vector<16x32xf32> to vector<16x32xbf16>
    %cst_37 = arith.constant dense<0.000000e+00> : vector<16x16xf32>
    %126 = tpu.matmul %124, %125, %cst_37 {dimension_numbers = #tpu.dot_dimension_numbers<[1], [1], [0], [0], [0, 0, 1, 0], [], []>} : vector<16x32xbf16>, vector<16x32xbf16>, vector<16x16xf32> -> vector<16x16xf32>
    %cst_38 = arith.constant 11.3137083 : f32
    %127 = vector.broadcast %cst_38 : f32 to vector<16x16xf32>
    %128 = arith.mulf %126, %127 : vector<16x16xf32>
    %cst_39 = arith.constant -1.000000e+30 : f32
    %129 = vector.broadcast %cst_39 : f32 to vector<16x16xf32>
    %130 = arith.select %29, %128, %129 : vector<16x16xi1>, vector<16x16xf32>
    %cst_40 = arith.constant dense<0xFF800000> : vector<16xf32>
    %131 = vector.multi_reduction <maximumf>, %130, %cst_40 [1] : vector<16x16xf32> to vector<16xf32>
    %132 = vector.shape_cast %131 : vector<16xf32> to vector<16x1xf32>
    %133 = vector.broadcast %132 : vector<16x1xf32> to vector<16x16xf32>
    %134 = arith.subf %130, %133 : vector<16x16xf32>
    %135 = math.exp %134 : vector<16x16xf32>
    %cst_41 = arith.constant dense<0.000000e+00> : vector<16xf32>
    %136 = vector.multi_reduction <add>, %135, %cst_41 [1] : vector<16x16xf32> to vector<16xf32>
    %137 = vector.shape_cast %136 : vector<16xf32> to vector<16x1xf32>
    %138 = tpu.reciprocal %137 {approx = true} : vector<16x1xf32> -> vector<16x1xf32>
    %139 = vector.broadcast %138 : vector<16x1xf32> to vector<16x16xf32>
    %140 = arith.mulf %135, %139 : vector<16x16xf32>
    %141 = arith.truncf %140 : vector<16x16xf32> to vector<16x16xbf16>
    %142 = vector.extract_strided_slice %26 {offsets = [0, 64], sizes = [16, 32], strides = [1, 1]} : vector<16x128xbf16> to vector<16x32xbf16>
    %cst_42 = arith.constant dense<0.000000e+00> : vector<16x32xf32>
    %143 = tpu.matmul %141, %142, %cst_42 {dimension_numbers = #tpu.dot_dimension_numbers<[1], [0], [0], [1], [0, 0, 1, 1], [], []>} : vector<16x16xbf16>, vector<16x32xbf16>, vector<16x32xf32> -> vector<16x32xf32>
    %144 = vector.extract_strided_slice %14 {offsets = [0, 96], sizes = [16, 32], strides = [1, 1]} : vector<16x128xf32> to vector<16x32xf32>
    %145 = arith.mulf %144, %144 : vector<16x32xf32>
    %cst_43 = arith.constant dense<0.000000e+00> : vector<16xf32>
    %146 = vector.multi_reduction <add>, %145, %cst_43 [1] : vector<16x32xf32> to vector<16xf32>
    %147 = vector.shape_cast %146 : vector<16xf32> to vector<16x1xf32>
    %148 = math.sqrt %147 : vector<16x1xf32>
    %cst_44 = arith.constant 1.1920929E-7 : f32
    %149 = vector.broadcast %cst_44 : f32 to vector<16x1xf32>
    %150 = arith.addf %148, %149 : vector<16x1xf32>
    %151 = vector.broadcast %150 : vector<16x1xf32> to vector<16x32xf32>
    %152 = arith.divf %144, %151 : vector<16x32xf32>
    %153 = vector.extract_strided_slice %15 {offsets = [0, 96], sizes = [16, 32], strides = [1, 1]} : vector<16x128xf32> to vector<16x32xf32>
    %154 = arith.mulf %153, %153 : vector<16x32xf32>
    %cst_45 = arith.constant dense<0.000000e+00> : vector<16xf32>
    %155 = vector.multi_reduction <add>, %154, %cst_45 [1] : vector<16x32xf32> to vector<16xf32>
    %156 = vector.shape_cast %155 : vector<16xf32> to vector<16x1xf32>
    %157 = math.sqrt %156 : vector<16x1xf32>
    %cst_46 = arith.constant 1.1920929E-7 : f32
    %158 = vector.broadcast %cst_46 : f32 to vector<16x1xf32>
    %159 = arith.addf %157, %158 : vector<16x1xf32>
    %160 = vector.broadcast %159 : vector<16x1xf32> to vector<16x32xf32>
    %161 = arith.divf %153, %160 : vector<16x32xf32>
    %162 = arith.truncf %152 : vector<16x32xf32> to vector<16x32xbf16>
    %163 = arith.truncf %161 : vector<16x32xf32> to vector<16x32xbf16>
    %cst_47 = arith.constant dense<0.000000e+00> : vector<16x16xf32>
    %164 = tpu.matmul %162, %163, %cst_47 {dimension_numbers = #tpu.dot_dimension_numbers<[1], [1], [0], [0], [0, 0, 1, 0], [], []>} : vector<16x32xbf16>, vector<16x32xbf16>, vector<16x16xf32> -> vector<16x16xf32>
    %cst_48 = arith.constant 11.3137083 : f32
    %165 = vector.broadcast %cst_48 : f32 to vector<16x16xf32>
    %166 = arith.mulf %164, %165 : vector<16x16xf32>
    %cst_49 = arith.constant -1.000000e+30 : f32
    %167 = vector.broadcast %cst_49 : f32 to vector<16x16xf32>
    %168 = arith.select %29, %166, %167 : vector<16x16xi1>, vector<16x16xf32>
    %cst_50 = arith.constant dense<0xFF800000> : vector<16xf32>
    %169 = vector.multi_reduction <maximumf>, %168, %cst_50 [1] : vector<16x16xf32> to vector<16xf32>
    %170 = vector.shape_cast %169 : vector<16xf32> to vector<16x1xf32>
    %171 = vector.broadcast %170 : vector<16x1xf32> to vector<16x16xf32>
    %172 = arith.subf %168, %171 : vector<16x16xf32>
    %173 = math.exp %172 : vector<16x16xf32>
    %cst_51 = arith.constant dense<0.000000e+00> : vector<16xf32>
    %174 = vector.multi_reduction <add>, %173, %cst_51 [1] : vector<16x16xf32> to vector<16xf32>
    %175 = vector.shape_cast %174 : vector<16xf32> to vector<16x1xf32>
    %176 = tpu.reciprocal %175 {approx = true} : vector<16x1xf32> -> vector<16x1xf32>
    %177 = vector.broadcast %176 : vector<16x1xf32> to vector<16x16xf32>
    %178 = arith.mulf %173, %177 : vector<16x16xf32>
    %179 = arith.truncf %178 : vector<16x16xf32> to vector<16x16xbf16>
    %180 = vector.extract_strided_slice %26 {offsets = [0, 96], sizes = [16, 32], strides = [1, 1]} : vector<16x128xbf16> to vector<16x32xbf16>
    %cst_52 = arith.constant dense<0.000000e+00> : vector<16x32xf32>
    %181 = tpu.matmul %179, %180, %cst_52 {dimension_numbers = #tpu.dot_dimension_numbers<[1], [0], [0], [1], [0, 0, 1, 1], [], []>} : vector<16x16xbf16>, vector<16x32xbf16>, vector<16x32xf32> -> vector<16x32xf32>
    %182 = tpu.concatenate %67, %105, %143, %181 in 1 : vector<16x32xf32>, vector<16x32xf32>, vector<16x32xf32>, vector<16x32xf32> -> vector<16x128xf32>
    %183 = arith.truncf %182 : vector<16x128xf32> to vector<16x128xbf16>
    %c0_53 = arith.constant 0 : index
    %c0_54 = arith.constant 0 : index
    %184 = vector.load %arg7[%c0_53, %c0_54] : memref<128x128xbf16, #tpu.memory_space<vmem>>, vector<128x128xbf16>
    %cst_55 = arith.constant dense<0.000000e+00> : vector<16x128xf32>
    %185 = tpu.matmul %183, %184, %cst_55 {dimension_numbers = #tpu.dot_dimension_numbers<[1], [0], [0], [1], [0, 0, 1, 1], [], []>} : vector<16x128xbf16>, vector<128x128xbf16>, vector<16x128xf32> -> vector<16x128xf32>
    %186 = arith.mulf %185, %185 : vector<16x128xf32>
    %cst_56 = arith.constant dense<0.000000e+00> : vector<16xf32>
    %187 = vector.multi_reduction <add>, %186, %cst_56 [1] : vector<16x128xf32> to vector<16xf32>
    %188 = vector.shape_cast %187 : vector<16xf32> to vector<16x1xf32>
    %189 = math.sqrt %188 : vector<16x1xf32>
    %cst_57 = arith.constant 1.1920929E-7 : f32
    %190 = vector.broadcast %cst_57 : f32 to vector<16x1xf32>
    %191 = arith.addf %189, %190 : vector<16x1xf32>
    %192 = vector.broadcast %191 : vector<16x1xf32> to vector<16x128xf32>
    %193 = arith.divf %185, %192 : vector<16x128xf32>
    %c0_58 = arith.constant 0 : index
    %c0_59 = arith.constant 0 : index
    %194 = vector.load %arg10[%c0_58, %c0_59] : memref<1x128xf32, #tpu.memory_space<vmem>>, vector<1x128xf32>
    %cst_60 = arith.constant 0.565685451 : f32
    %195 = vector.broadcast %cst_60 : f32 to vector<1x128xf32>
    %196 = arith.mulf %194, %195 : vector<1x128xf32>
    %197 = math.absf %196 : vector<1x128xf32>
    %198 = arith.subf %193, %10 : vector<16x128xf32>
    %199 = vector.broadcast %197 : vector<1x128xf32> to vector<16x128xf32>
    %200 = arith.mulf %199, %198 : vector<16x128xf32>
    %201 = arith.addf %10, %200 : vector<16x128xf32>
    %202 = arith.mulf %201, %201 : vector<16x128xf32>
    %cst_61 = arith.constant dense<0.000000e+00> : vector<16xf32>
    %203 = vector.multi_reduction <add>, %202, %cst_61 [1] : vector<16x128xf32> to vector<16xf32>
    %204 = vector.shape_cast %203 : vector<16xf32> to vector<16x1xf32>
    %205 = math.sqrt %204 : vector<16x1xf32>
    %cst_62 = arith.constant 1.1920929E-7 : f32
    %206 = vector.broadcast %cst_62 : f32 to vector<16x1xf32>
    %207 = arith.addf %205, %206 : vector<16x1xf32>
    %208 = vector.broadcast %207 : vector<16x1xf32> to vector<16x128xf32>
    %209 = arith.divf %201, %208 : vector<16x128xf32>
    %210 = arith.truncf %209 : vector<16x128xf32> to vector<16x128xbf16>
    %c0_63 = arith.constant 0 : index
    %c0_64 = arith.constant 0 : index
    %211 = vector.load %arg8[%c0_63, %c0_64] : memref<128x512xbf16, #tpu.memory_space<vmem>>, vector<128x512xbf16>
    %cst_65 = arith.constant dense<0.000000e+00> : vector<16x512xf32>
    %212 = tpu.matmul %210, %211, %cst_65 {dimension_numbers = #tpu.dot_dimension_numbers<[1], [0], [0], [1], [0, 0, 1, 1], [], []>} : vector<16x128xbf16>, vector<128x512xbf16>, vector<16x512xf32> -> vector<16x512xf32>
    %cst_66 = arith.constant 0.000000e+00 : f32
    %213 = vector.broadcast %cst_66 : f32 to vector<16x512xf32>
    %214 = arith.maximumf %212, %213 : vector<16x512xf32>
    %215 = arith.mulf %214, %214 : vector<16x512xf32>
    %216 = arith.truncf %215 : vector<16x512xf32> to vector<16x512xbf16>
    %c0_67 = arith.constant 0 : index
    %c0_68 = arith.constant 0 : index
    %217 = vector.load %arg9[%c0_67, %c0_68] : memref<512x128xbf16, #tpu.memory_space<vmem>>, vector<512x128xbf16>
    %cst_69 = arith.constant dense<0.000000e+00> : vector<16x128xf32>
    %218 = tpu.matmul %216, %217, %cst_69 {dimension_numbers = #tpu.dot_dimension_numbers<[1], [0], [0], [1], [0, 0, 1, 1], [], []>} : vector<16x512xbf16>, vector<512x128xbf16>, vector<16x128xf32> -> vector<16x128xf32>
    %219 = arith.mulf %218, %218 : vector<16x128xf32>
    %cst_70 = arith.constant dense<0.000000e+00> : vector<16xf32>
    %220 = vector.multi_reduction <add>, %219, %cst_70 [1] : vector<16x128xf32> to vector<16xf32>
    %221 = vector.shape_cast %220 : vector<16xf32> to vector<16x1xf32>
    %222 = math.sqrt %221 : vector<16x1xf32>
    %cst_71 = arith.constant 1.1920929E-7 : f32
    %223 = vector.broadcast %cst_71 : f32 to vector<16x1xf32>
    %224 = arith.addf %222, %223 : vector<16x1xf32>
    %225 = vector.broadcast %224 : vector<16x1xf32> to vector<16x128xf32>
    %226 = arith.divf %218, %225 : vector<16x128xf32>
    %c0_72 = arith.constant 0 : index
    %c0_73 = arith.constant 0 : index
    %227 = vector.load %arg11[%c0_72, %c0_73] : memref<1x128xf32, #tpu.memory_space<vmem>>, vector<1x128xf32>
    %cst_74 = arith.constant 0.565685451 : f32
    %228 = vector.broadcast %cst_74 : f32 to vector<1x128xf32>
    %229 = arith.mulf %227, %228 : vector<1x128xf32>
    %230 = math.absf %229 : vector<1x128xf32>
    %231 = arith.subf %226, %209 : vector<16x128xf32>
    %232 = vector.broadcast %230 : vector<1x128xf32> to vector<16x128xf32>
    %233 = arith.mulf %232, %231 : vector<16x128xf32>
    %234 = arith.addf %209, %233 : vector<16x128xf32>
    %235 = arith.mulf %234, %234 : vector<16x128xf32>
    %cst_75 = arith.constant dense<0.000000e+00> : vector<16xf32>
    %236 = vector.multi_reduction <add>, %235, %cst_75 [1] : vector<16x128xf32> to vector<16xf32>
    %237 = vector.shape_cast %236 : vector<16xf32> to vector<16x1xf32>
    %238 = math.sqrt %237 : vector<16x1xf32>
    %cst_76 = arith.constant 1.1920929E-7 : f32
    %239 = vector.broadcast %cst_76 : f32 to vector<16x1xf32>
    %240 = arith.addf %238, %239 : vector<16x1xf32>
    %241 = vector.broadcast %240 : vector<16x1xf32> to vector<16x128xf32>
    %242 = arith.divf %234, %241 : vector<16x128xf32>
    %c0_77 = arith.constant 0 : index
    %c0_78 = arith.constant 0 : index
    %c0_79 = arith.constant 0 : index
    %243 = vector.load %arg12[%c0_77, %c0_78, %c0_79] : memref<1x16x128xf32, #tpu.memory_space<vmem>>, vector<1x16x128xf32>
    %244 = vector.shape_cast %243 : vector<1x16x128xf32> to vector<16x128xf32>
    %245 = vector.shape_cast %242 : vector<16x128xf32> to vector<1x16x128xf32>
    tpu.vector_store %arg12[%c0_77, %c0_78, %c0_79], %245 {strides = array<i32>} : memref<1x16x128xf32, #tpu.memory_space<vmem>>, vector<1x16x128xf32>,
    return
  }
  func.func @transform_0(%arg0: i32) -> i32 {
    %c0_i32 = arith.constant 0 : i32
    %c0_i32_0 = arith.constant 0 : i32
    return %c0_i32 : i32
  }
  func.func @transform_1(%arg0: i32) -> i32 {
    %c0_i32 = arith.constant 0 : i32
    %c0_i32_0 = arith.constant 0 : i32
    return %c0_i32 : i32
  }
  func.func @transform_2(%arg0: i32) -> (i32, i32, i32) {
    %c0_i32 = arith.constant 0 : i32
    %c0_i32_0 = arith.constant 0 : i32
    %c0_i32_1 = arith.constant 0 : i32
    return %arg0, %c0_i32, %c0_i32_0 : i32, i32, i32
  }
  func.func @transform_3(%arg0: i32) -> (i32, i32, i32) {
    %c0_i32 = arith.constant 0 : i32
    %c0_i32_0 = arith.constant 0 : i32
    %c0_i32_1 = arith.constant 0 : i32
    return %arg0, %c0_i32, %c0_i32_0 : i32, i32, i32
  }
  func.func @transform_4(%arg0: i32) -> (i32, i32, i32) {
    %c0_i32 = arith.constant 0 : i32
    %c0_i32_0 = arith.constant 0 : i32
    %c0_i32_1 = arith.constant 0 : i32
    return %arg0, %c0_i32, %c0_i32_0 : i32, i32, i32
  }
  func.func @transform_5(%arg0: i32) -> (i32, i32) {
    %c0_i32 = arith.constant 0 : i32
    %c0_i32_0 = arith.constant 0 : i32
    %c0_i32_1 = arith.constant 0 : i32
    return %c0_i32, %c0_i32_0 : i32, i32
  }
  func.func @transform_6(%arg0: i32) -> (i32, i32) {
    %c0_i32 = arith.constant 0 : i32
    %c0_i32_0 = arith.constant 0 : i32
    %c0_i32_1 = arith.constant 0 : i32
    return %c0_i32, %c0_i32_0 : i32, i32
  }
  func.func @transform_7(%arg0: i32) -> (i32, i32) {
    %c0_i32 = arith.constant 0 : i32
    %c0_i32_0 = arith.constant 0 : i32
    %c0_i32_1 = arith.constant 0 : i32
    return %c0_i32, %c0_i32_0 : i32, i32
  }
  func.func @transform_8(%arg0: i32) -> (i32, i32) {
    %c0_i32 = arith.constant 0 : i32
    %c0_i32_0 = arith.constant 0 : i32
    %c0_i32_1 = arith.constant 0 : i32
    return %c0_i32, %c0_i32_0 : i32, i32
  }
  func.func @transform_9(%arg0: i32) -> (i32, i32) {
    %c0_i32 = arith.constant 0 : i32
    %c0_i32_0 = arith.constant 0 : i32
    %c0_i32_1 = arith.constant 0 : i32
    return %c0_i32, %c0_i32_0 : i32, i32
  }
  func.func @transform_10(%arg0: i32) -> (i32, i32) {
    %c0_i32 = arith.constant 0 : i32
    %c0_i32_0 = arith.constant 0 : i32
    %c0_i32_1 = arith.constant 0 : i32
    return %c0_i32, %c0_i32_0 : i32, i32
  }
  func.func @transform_11(%arg0: i32) -> (i32, i32, i32) {
    %c0_i32 = arith.constant 0 : i32
    %c0_i32_0 = arith.constant 0 : i32
    %c0_i32_1 = arith.constant 0 : i32
    return %arg0, %c0_i32, %c0_i32_0 : i32, i32, i32
  }
}

</mosaic_0001>

<llo_original>
// kernel: tpu_custom_call.1
$region0: #{tpu_custom_call.1}
  #allocation0 [shape = 'u32[]', space=smem, size = 0x4, offset = 0x4, fixed_abs, tag = 'smem constant byte address 0x4 - core index']
  #allocation1 [shape = 'u32[144,128]{1,0:T(1,128)}', space=vmem, size = 0x12000, scoped, tag = 'internal scratch']
  %s0 = inlined_call_operand.hbm [shape: f32[2], index: 0, kind: input, shape index: {}]
  %s1 = inlined_call_operand.vmem [shape: f32[2], index: 1, kind: input, shape index: {}]
  %s2 = inlined_call_operand.hbm [shape: f32[2,16,128], index: 2, kind: input, shape index: {}]
  %s3 = inlined_call_operand.hbm [shape: f32[2,16,128], index: 3, kind: input, shape index: {}]
  %s4 = inlined_call_operand.hbm [shape: f32[2,16,128], index: 4, kind: input, shape index: {}]
  %s5 = inlined_call_operand.hbm [shape: bf16[128,384], index: 5, kind: input, shape index: {}]
  %s6 = inlined_call_operand.hbm [shape: bf16[128,128], index: 6, kind: input, shape index: {}]
  %s7 = inlined_call_operand.hbm [shape: bf16[128,512], index: 7, kind: input, shape index: {}]
  %s8 = inlined_call_operand.hbm [shape: bf16[512,128], index: 8, kind: input, shape index: {}]
  %s9 = inlined_call_operand.vmem [shape: f32[1,128], index: 9, kind: input, shape index: {}]
  %s10 = inlined_call_operand.vmem [shape: f32[1,128], index: 10, kind: input, shape index: {}]
  %s11 = inlined_call_operand.hbm [shape: f32[2,16,128], index: 11, kind: output, shape index: {}]
  %s12 = sld [smem:[#allocation0]]
  $region113: #{tpu_custom_call.1} parent=0
    _
  %s14 = ssub.s32 1, %s12
  %s15 = scalar_select 0, %s14, %s12
  $region1: #{tpu_custom_call.1} parent=0
    #allocation2 [shape = 'u8[512]{0}', space=smem, size = 0x200, scoped, tag = 'input window, operand 0, single buffered']
    #allocation3 [shape = 's32[2]{0}', space=sflag, size = 0x8, scoped, tag = 'scoped memory for tpu_custom_call.1']
    #allocation4 [shape = 's32[2]{0}', space=sflag, size = 0x8, scoped, tag = 'scoped memory for tpu_custom_call.1']
    #allocation5 [shape = 's32[2]{0}', space=sflag, size = 0x8, scoped, tag = 'scoped memory for tpu_custom_call.1']
    #allocation6 [shape = 's32[2]{0}', space=sflag, size = 0x8, scoped, tag = 'scoped memory for tpu_custom_call.1']
    #allocation7 [shape = 'u8[512]{0}', space=smem, size = 0x200, scoped, tag = 'input window, operand 1, single buffered']
    #allocation8 [shape = 'u8[16384]{0}', space=vmem, size = 0x4000, scoped, tag = 'input window, operand 2']
    #allocation9 [shape = 'u8[16384]{0}', space=vmem, size = 0x4000, scoped, tag = 'input window, operand 3']
    #allocation10 [shape = 's32[2]{0}', space=sflag, size = 0x8, scoped, tag = 'scoped memory for tpu_custom_call.1']
    #allocation11 [shape = 'u8[16384]{0}', space=vmem, size = 0x4000, scoped, tag = 'input window, operand 4']
    #allocation12 [shape = 'u8[98304]{0}', space=vmem, size = 0x18000, scoped, tag = 'input window, operand 5, single buffered']
    #allocation13 [shape = 's32[1]{0}', space=sflag, size = 0x4, scoped, tag = 'scoped memory for tpu_custom_call.1']
    #allocation14 [shape = 'u8[32768]{0}', space=vmem, size = 0x8000, scoped, tag = 'input window, operand 6, single buffered']
    #allocation15 [shape = 'u8[131072]{0}', space=vmem, size = 0x20000, scoped, tag = 'input window, operand 7, single buffered']
    #allocation16 [shape = 's32[1]{0}', space=sflag, size = 0x4, scoped, tag = 'scoped memory for tpu_custom_call.1']
    #allocation17 [shape = 'u8[131072]{0}', space=vmem, size = 0x20000, scoped, tag = 'input window, operand 8, single buffered']
    #allocation18 [shape = 'u8[16384]{0}', space=vmem, size = 0x4000, scoped, tag = 'output window, operand 0']
    %16 = vsyncpa [#allocation5], 0
    %17 = vsyncpa [#allocation6], 0
    %18 = vsyncpa [#allocation3], 0
    %s19 = scalar_lea.sflag [#allocation3], 1
    %20 = vsyncpa %s19, 0
    %21 = vsyncpa [#allocation10], 0
    %s22 = scalar_lea.sflag [#allocation10], 1
    %23 = vsyncpa %s22, 0
    %24 = vsyncpa [#allocation13], 0
    %25 = vsyncpa [#allocation16], 0
    %26 = vsyncpa [#allocation4], 0
    %s27 = scalar_lea.sflag [#allocation4], 1
    %28 = vsyncpa %s27, 0
    loop: start=0, step=1, limit=4
    $region2: #{tpu_custom_call.1} parent=1 // loop_pre_header
      _
    $region3: #{tpu_custom_call.1} parent=1 // loop_header
      %s30 = sphi 0, %s34
      %p31 = scmp.ge.s32.totalorder %s30, 4
      %s38 = sphi 0, %s38
      %s40 = sphi 0, %s38
      %s41 = sphi 0, %s40
      %s55 = sphi 0, %s41
      %s59 = sphi 0, %s59
      %s61 = sphi 0, %s59
      %s62 = sphi 0, %s61
      %s76 = sphi 0, %s62
      %s82 = sphi 0, %s84
      %s85 = sphi 0, %s82
      %s86 = sphi 0, %s85
      %s102 = sphi 0, %s86
      %s108 = sphi 0, %s110
      %s111 = sphi 0, %s108
      %s112 = sphi 0, %s111
      %s128 = sphi 0, %s112
      %s134 = sphi 0, %s136
      %s137 = sphi 0, %s134
      %s138 = sphi 0, %s137
      %s154 = sphi 0, %s138
      %s158 = sphi 0, %s158
      %s160 = sphi 0, %s158
      %s161 = sphi 0, %s160
      %s175 = sphi 0, %s161
      %s179 = sphi 0, %s179
      %s181 = sphi 0, %s179
      %s182 = sphi 0, %s181
      %s196 = sphi 0, %s182
      %s200 = sphi 0, %s200
      %s202 = sphi 0, %s200
      %s203 = sphi 0, %s202
      %s217 = sphi 0, %s203
      %s221 = sphi 0, %s221
      %s223 = sphi 0, %s221
      %s224 = sphi 0, %s223
      %s238 = sphi 0, %s224
      %s242 = sphi 0, %s242
      %s244 = sphi 0, %s242
      %s245 = sphi 0, %s244
      %s259 = sphi 0, %s245
      %s263 = sphi 0, %s263
      %s265 = sphi 0, %s263
      %s266 = sphi 0, %s265
      %s280 = sphi 0, %s266
      %s286 = sphi 0, %s288
      %s289 = sphi 0, %s286
      %s290 = sphi 0, %s289
      %s306 = sphi 0, %s290
    $region4: #{tpu_custom_call.1} parent=1 // loop_header_branch
      %33 = sbr.rel (%p31) target = $region8
    $region5: #{tpu_custom_call.1} parent=1 // loop_body
      %s35 = ssub.s32 %s30, 1
      %s36 = ssub.s32 %s30, 2
      %s37 = sadd.s32 %s30, 1
      %s39 = sadd.s32 %s38, 1
      %p42 = scmp.eq.s32.totalorder %s30, 1
      %p43 = scmp.ne.s32.totalorder %s38, %s40
      %p44 = scmp.eq.s32.totalorder %s30, 0
      %p45 = por %p43, %p44
      %p46 = scmp.ne.s32.totalorder %s38, %s40
      %p47 = scmp.eq.s32.totalorder %s35, 1
      %p48 = por %p46, %p47
      %p49 = scmp.ne.s32.totalorder %s40, %s41
      %p50 = scmp.eq.s32.totalorder %s35, 0
      %p51 = por %p49, %p50
      %p52 = scmp.ne.s32.totalorder %s40, %s41
      %p53 = scmp.eq.s32.totalorder %s36, 1
      %p54 = por %p52, %p53
      %p56 = scmp.ne.s32.totalorder %s41, %s55
      %p57 = scmp.eq.s32.totalorder %s36, 0
      %p58 = por %p56, %p57
      %s60 = sadd.s32 %s59, 1
      %p63 = scmp.eq.s32.totalorder %s30, 1
      %p64 = scmp.ne.s32.totalorder %s59, %s61
      %p65 = scmp.eq.s32.totalorder %s30, 0
      %p66 = por %p64, %p65
      %p67 = scmp.ne.s32.totalorder %s59, %s61
      %p68 = scmp.eq.s32.totalorder %s35, 1
      %p69 = por %p67, %p68
      %p70 = scmp.ne.s32.totalorder %s61, %s62
      %p71 = scmp.eq.s32.totalorder %s35, 0
      %p72 = por %p70, %p71
      %p73 = scmp.ne.s32.totalorder %s61, %s62
      %p74 = scmp.eq.s32.totalorder %s36, 1
      %p75 = por %p73, %p74
      %p77 = scmp.ne.s32.totalorder %s62, %s76
      %p78 = scmp.eq.s32.totalorder %s36, 0
      %p79 = por %p77, %p78
      %s80 = ssub.s32 %s30, %s37
      %p81 = scmp.eq.s32.totalorder %s80, 0
      %s83 = sadd.s32 %s82, 1
      %s84 = scalar_select %p81, %s82, %s83
      %p87 = pneg %p81
      %p88 = scmp.eq.s32.totalorder %s30, 1
      %p89 = por %p87, %p88
      %p90 = scmp.ne.s32.totalorder %s82, %s85
      %p91 = scmp.eq.s32.totalorder %s30, 0
      %p92 = por %p90, %p91
      %p93 = scmp.ne.s32.totalorder %s82, %s85
      %p94 = scmp.eq.s32.totalorder %s35, 1
      %p95 = por %p93, %p94
      %p96 = scmp.ne.s32.totalorder %s85, %s86
      %p97 = scmp.eq.s32.totalorder %s35, 0
      %p98 = por %p96, %p97
      %p99 = scmp.ne.s32.totalorder %s85, %s86
      %p100 = scmp.eq.s32.totalorder %s36, 1
      %p101 = por %p99, %p100
      %p103 = scmp.ne.s32.totalorder %s86, %s102
      %p104 = scmp.eq.s32.totalorder %s36, 0
      %p105 = por %p103, %p104
      %s106 = ssub.s32 %s30, %s37
      %p107 = scmp.eq.s32.totalorder %s106, 0
      %s109 = sadd.s32 %s108, 1
      %s110 = scalar_select %p107, %s108, %s109
      %p113 = pneg %p107
      %p114 = scmp.eq.s32.totalorder %s30, 1
      %p115 = por %p113, %p114
      %p116 = scmp.ne.s32.totalorder %s108, %s111
      %p117 = scmp.eq.s32.totalorder %s30, 0
      %p118 = por %p116, %p117
      %p119 = scmp.ne.s32.totalorder %s108, %s111
      %p120 = scmp.eq.s32.totalorder %s35, 1
      %p121 = por %p119, %p120
      %p122 = scmp.ne.s32.totalorder %s111, %s112
      %p123 = scmp.eq.s32.totalorder %s35, 0
      %p124 = por %p122, %p123
      %p125 = scmp.ne.s32.totalorder %s111, %s112
      %p126 = scmp.eq.s32.totalorder %s36, 1
      %p127 = por %p125, %p126
      %p129 = scmp.ne.s32.totalorder %s112, %s128
      %p130 = scmp.eq.s32.totalorder %s36, 0
      %p131 = por %p129, %p130
      %s132 = ssub.s32 %s30, %s37
      %p133 = scmp.eq.s32.totalorder %s132, 0
      %s135 = sadd.s32 %s134, 1
      %s136 = scalar_select %p133, %s134, %s135
      %p139 = pneg %p133
      %p140 = scmp.eq.s32.totalorder %s30, 1
      %p141 = por %p139, %p140
      %p142 = scmp.ne.s32.totalorder %s134, %s137
      %p143 = scmp.eq.s32.totalorder %s30, 0
      %p144 = por %p142, %p143
      %p145 = scmp.ne.s32.totalorder %s134, %s137
      %p146 = scmp.eq.s32.totalorder %s35, 1
      %p147 = por %p145, %p146
      %p148 = scmp.ne.s32.totalorder %s137, %s138
      %p149 = scmp.eq.s32.totalorder %s35, 0
      %p150 = por %p148, %p149
      %p151 = scmp.ne.s32.totalorder %s137, %s138
      %p152 = scmp.eq.s32.totalorder %s36, 1
      %p153 = por %p151, %p152
      %p155 = scmp.ne.s32.totalorder %s138, %s154
      %p156 = scmp.eq.s32.totalorder %s36, 0
      %p157 = por %p155, %p156
      %s159 = sadd.s32 %s158, 1
      %p162 = scmp.eq.s32.totalorder %s30, 1
      %p163 = scmp.ne.s32.totalorder %s158, %s160
      %p164 = scmp.eq.s32.totalorder %s30, 0
      %p165 = por %p163, %p164
      %p166 = scmp.ne.s32.totalorder %s158, %s160
      %p167 = scmp.eq.s32.totalorder %s35, 1
      %p168 = por %p166, %p167
      %p169 = scmp.ne.s32.totalorder %s160, %s161
      %p170 = scmp.eq.s32.totalorder %s35, 0
      %p171 = por %p169, %p170
      %p172 = scmp.ne.s32.totalorder %s160, %s161
      %p173 = scmp.eq.s32.totalorder %s36, 1
      %p174 = por %p172, %p173
      %p176 = scmp.ne.s32.totalorder %s161, %s175
      %p177 = scmp.eq.s32.totalorder %s36, 0
      %p178 = por %p176, %p177
      %s180 = sadd.s32 %s179, 1
      %p183 = scmp.eq.s32.totalorder %s30, 1
      %p184 = scmp.ne.s32.totalorder %s179, %s181
      %p185 = scmp.eq.s32.totalorder %s30, 0
      %p186 = por %p184, %p185
      %p187 = scmp.ne.s32.totalorder %s179, %s181
      %p188 = scmp.eq.s32.totalorder %s35, 1
      %p189 = por %p187, %p188
      %p190 = scmp.ne.s32.totalorder %s181, %s182
      %p191 = scmp.eq.s32.totalorder %s35, 0
      %p192 = por %p190, %p191
      %p193 = scmp.ne.s32.totalorder %s181, %s182
      %p194 = scmp.eq.s32.totalorder %s36, 1
      %p195 = por %p193, %p194
      %p197 = scmp.ne.s32.totalorder %s182, %s196
      %p198 = scmp.eq.s32.totalorder %s36, 0
      %p199 = por %p197, %p198
      %s201 = sadd.s32 %s200, 1
      %p204 = scmp.eq.s32.totalorder %s30, 1
      %p205 = scmp.ne.s32.totalorder %s200, %s202
      %p206 = scmp.eq.s32.totalorder %s30, 0
      %p207 = por %p205, %p206
      %p208 = scmp.ne.s32.totalorder %s200, %s202
      %p209 = scmp.eq.s32.totalorder %s35, 1
      %p210 = por %p208, %p209
      %p211 = scmp.ne.s32.totalorder %s202, %s203
      %p212 = scmp.eq.s32.totalorder %s35, 0
      %p213 = por %p211, %p212
      %p214 = scmp.ne.s32.totalorder %s202, %s203
      %p215 = scmp.eq.s32.totalorder %s36, 1
      %p216 = por %p214, %p215
      %p218 = scmp.ne.s32.totalorder %s203, %s217
      %p219 = scmp.eq.s32.totalorder %s36, 0
      %p220 = por %p218, %p219
      %s222 = sadd.s32 %s221, 1
      %p225 = scmp.eq.s32.totalorder %s30, 1
      %p226 = scmp.ne.s32.totalorder %s221, %s223
      %p227 = scmp.eq.s32.totalorder %s30, 0
      %p228 = por %p226, %p227
      %p229 = scmp.ne.s32.totalorder %s221, %s223
      %p230 = scmp.eq.s32.totalorder %s35, 1
      %p231 = por %p229, %p230
      %p232 = scmp.ne.s32.totalorder %s223, %s224
      %p233 = scmp.eq.s32.totalorder %s35, 0
      %p234 = por %p232, %p233
      %p235 = scmp.ne.s32.totalorder %s223, %s224
      %p236 = scmp.eq.s32.totalorder %s36, 1
      %p237 = por %p235, %p236
      %p239 = scmp.ne.s32.totalorder %s224, %s238
      %p240 = scmp.eq.s32.totalorder %s36, 0
      %p241 = por %p239, %p240
      %s243 = sadd.s32 %s242, 1
      %p246 = scmp.eq.s32.totalorder %s30, 1
      %p247 = scmp.ne.s32.totalorder %s242, %s244
      %p248 = scmp.eq.s32.totalorder %s30, 0
      %p249 = por %p247, %p248
      %p250 = scmp.ne.s32.totalorder %s242, %s244
      %p251 = scmp.eq.s32.totalorder %s35, 1
      %p252 = por %p250, %p251
      %p253 = scmp.ne.s32.totalorder %s244, %s245
      %p254 = scmp.eq.s32.totalorder %s35, 0
      %p255 = por %p253, %p254
      %p256 = scmp.ne.s32.totalorder %s244, %s245
      %p257 = scmp.eq.s32.totalorder %s36, 1
      %p258 = por %p256, %p257
      %p260 = scmp.ne.s32.totalorder %s245, %s259
      %p261 = scmp.eq.s32.totalorder %s36, 0
      %p262 = por %p260, %p261
      %s264 = sadd.s32 %s263, 1
      %p267 = scmp.eq.s32.totalorder %s30, 1
      %p268 = scmp.ne.s32.totalorder %s263, %s265
      %p269 = scmp.eq.s32.totalorder %s30, 0
      %p270 = por %p268, %p269
      %p271 = scmp.ne.s32.totalorder %s263, %s265
      %p272 = scmp.eq.s32.totalorder %s35, 1
      %p273 = por %p271, %p272
      %p274 = scmp.ne.s32.totalorder %s265, %s266
      %p275 = scmp.eq.s32.totalorder %s35, 0
      %p276 = por %p274, %p275
      %p277 = scmp.ne.s32.totalorder %s265, %s266
      %p278 = scmp.eq.s32.totalorder %s36, 1
      %p279 = por %p277, %p278
      %p281 = scmp.ne.s32.totalorder %s266, %s280
      %p282 = scmp.eq.s32.totalorder %s36, 0
      %p283 = por %p281, %p282
      %s284 = ssub.s32 %s30, %s37
      %p285 = scmp.eq.s32.totalorder %s284, 0
      %s287 = sadd.s32 %s286, 1
      %s288 = scalar_select %p285, %s286, %s287
      %p291 = pneg %p285
      %p292 = scmp.eq.s32.totalorder %s30, 1
      %p293 = por %p291, %p292
      %p294 = scmp.ne.s32.totalorder %s286, %s289
      %p295 = scmp.eq.s32.totalorder %s30, 0
      %p296 = por %p294, %p295
      %p297 = scmp.ne.s32.totalorder %s286, %s289
      %p298 = scmp.eq.s32.totalorder %s35, 1
      %p299 = por %p297, %p298
      %p300 = scmp.ne.s32.totalorder %s289, %s290
      %p301 = scmp.eq.s32.totalorder %s35, 0
      %p302 = por %p300, %p301
      %p303 = scmp.ne.s32.totalorder %s289, %s290
      %p304 = scmp.eq.s32.totalorder %s36, 1
      %p305 = por %p303, %p304
      %p307 = scmp.ne.s32.totalorder %s290, %s306
      %p308 = scmp.eq.s32.totalorder %s36, 0
      %p309 = por %p307, %p308
      %p310 = scmp.le.s32.totalorder 1, %s30
      %p311 = scmp.lt.s32.totalorder %s30, 3
      %p312 = pnand %p310, %p311
      %p313 = pneg %p312
      // Predicated region
      $region9: #{tpu_custom_call.1} parent=5 // pred_check
        _
      $region10: #{tpu_custom_call.1} parent=5 // pred_check_branch
        %315 = sbr.rel (%p312) target = $region12
      $region11: #{tpu_custom_call.1} parent=5 // pred_region
        %s316 = ssub.s32 %s30, 1
        // Predicated region
        $region13: #{tpu_custom_call.1} parent=11 // pred_check
          %p317 = pneg %p51
        $region14: #{tpu_custom_call.1} parent=11 // pred_check_branch
          %319 = sbr.rel (%p317) target = $region16
        $region15: #{tpu_custom_call.1} parent=11 // pred_region
          %s321 = ssub.s32 16, 16
          %322 = vsyncadd [#allocation5], %s321
          %325 = dma.hbm_to_smem %s0, 16, [#allocation2], [#allocation5]
        $region16: #{tpu_custom_call.1} parent=11 // pred_fallthru
          _
        // Predicated region
        $region17: #{tpu_custom_call.1} parent=11 // pred_check
          %p326 = pneg %p72
        $region18: #{tpu_custom_call.1} parent=11 // pred_check_branch
          %328 = sbr.rel (%p326) target = $region20
        $region19: #{tpu_custom_call.1} parent=11 // pred_region
          %s330 = ssub.s32 16, 16
          %331 = vsyncadd [#allocation6], %s330
          %s333 = sshll.u32 %s1, 4
          %s334 = int_to_ptr.vmem [resolvable:$true] %s333
          %336 = dma.vmem_to_smem %s334, 16, [#allocation7], [#allocation6]
        $region20: #{tpu_custom_call.1} parent=11 // pred_fallthru
          _
        // Predicated region
        $region21: #{tpu_custom_call.1} parent=11 // pred_check
          %p337 = pneg %p171
        $region22: #{tpu_custom_call.1} parent=11 // pred_check_branch
          %339 = sbr.rel (%p337) target = $region24
        $region23: #{tpu_custom_call.1} parent=11 // pred_region
          %s341 = ssub.s32 3072, 3072
          %342 = vsyncadd [#allocation13], %s341
          %s343 = sshll.u32 [#allocation12], 4
          %s344 = int_to_ptr.vmem [resolvable:$true] %s343
          %349 = dma.hbm_to_vmem [thread:$0]  %s5, 3072, %s344, [#allocation13], 192, 192, 12
        $region24: #{tpu_custom_call.1} parent=11 // pred_fallthru
          _
        // Predicated region
        $region25: #{tpu_custom_call.1} parent=11 // pred_check
          %p350 = pneg %p192
        $region26: #{tpu_custom_call.1} parent=11 // pred_check_branch
          %352 = sbr.rel (%p350) target = $region28
        $region27: #{tpu_custom_call.1} parent=11 // pred_region
          %s354 = ssub.s32 1024, 1024
          %355 = vsyncadd [#allocation13], %s354
          %s356 = sshll.u32 [#allocation14], 4
          %s357 = int_to_ptr.vmem [resolvable:$true] %s356
          %362 = dma.hbm_to_vmem [thread:$0]  %s6, 1024, %s357, [#allocation13], 64, 64, 4
        $region28: #{tpu_custom_call.1} parent=11 // pred_fallthru
          _
        // Predicated region
        $region29: #{tpu_custom_call.1} parent=11 // pred_check
          %p363 = pneg %p213
        $region30: #{tpu_custom_call.1} parent=11 // pred_check_branch
          %365 = sbr.rel (%p363) target = $region32
        $region31: #{tpu_custom_call.1} parent=11 // pred_region
          %s367 = ssub.s32 4096, 4096
          %368 = vsyncadd [#allocation16], %s367
          %s369 = sshll.u32 [#allocation15], 4
          %s370 = int_to_ptr.vmem [resolvable:$true] %s369
          %375 = dma.hbm_to_vmem [thread:$0]  %s7, 4096, %s370, [#allocation16], 256, 256, 16
        $region32: #{tpu_custom_call.1} parent=11 // pred_fallthru
          _
        // Predicated region
        $region33: #{tpu_custom_call.1} parent=11 // pred_check
          %p376 = pneg %p234
        $region34: #{tpu_custom_call.1} parent=11 // pred_check_branch
          %378 = sbr.rel (%p376) target = $region36
        $region35: #{tpu_custom_call.1} parent=11 // pred_region
          %s380 = ssub.s32 4096, 4096
          %381 = vsyncadd [#allocation16], %s380
          %s382 = sshll.u32 [#allocation17], 4
          %s383 = int_to_ptr.vmem [resolvable:$true] %s382
          %388 = dma.hbm_to_vmem [thread:$0]  %s8, 4096, %s383, [#allocation16], 64, 64, 4
        $region36: #{tpu_custom_call.1} parent=11 // pred_fallthru
          _
        // Predicated region
        $region37: #{tpu_custom_call.1} parent=11 // pred_check
          %p389 = pneg %p255
        $region38: #{tpu_custom_call.1} parent=11 // pred_check_branch
          %391 = sbr.rel (%p389) target = $region40
        $region39: #{tpu_custom_call.1} parent=11 // pred_region
          _
        $region40: #{tpu_custom_call.1} parent=11 // pred_fallthru
          _
        // Predicated region
        $region41: #{tpu_custom_call.1} parent=11 // pred_check
          %p392 = pneg %p276
        $region42: #{tpu_custom_call.1} parent=11 // pred_check_branch
          %394 = sbr.rel (%p392) target = $region44
        $region43: #{tpu_custom_call.1} parent=11 // pred_region
          _
        $region44: #{tpu_custom_call.1} parent=11 // pred_fallthru
          _
      $region12: #{tpu_custom_call.1} parent=5 // pred_fallthru
        _
      %p395 = scmp.lt.s32.totalorder %s30, 2
      // Predicated region
      $region45: #{tpu_custom_call.1} parent=5 // pred_check
        %p396 = pneg %p395
      $region46: #{tpu_custom_call.1} parent=5 // pred_check_branch
        %398 = sbr.rel (%p396) target = $region48
      $region47: #{tpu_custom_call.1} parent=5 // pred_region
        // Predicated region
        $region49: #{tpu_custom_call.1} parent=47 // pred_check
          %p399 = pneg %p92
        $region50: #{tpu_custom_call.1} parent=47 // pred_check_branch
          %401 = sbr.rel (%p399) target = $region52
        $region51: #{tpu_custom_call.1} parent=47 // pred_region
          %s402 = sand.u32 %s82, 1
          %s403 = scalar_lea.sflag [#allocation3], %s402
          %s404 = sand.u32 %s82, 1
          %s405 = smul.addr %s404, 16
          %s406 = scalar_lea.vmem [#allocation8], %s405
          %s408 = ssub.s32 256, 256
          %409 = vsyncadd %s403, %s408
          %s410 = smul.addr %s30, 2
          %s411 = smul.addr %s410, 128
          %s412 = scalar_lea.hbm %s2, %s411
          %s413 = sshll.u32 %s406, 4
          %s414 = int_to_ptr.vmem [resolvable:$true] %s413
          %419 = dma.hbm_to_vmem [thread:$0]  %s412, 256, %s414, %s403, 128, 128, 8
        $region52: #{tpu_custom_call.1} parent=47 // pred_fallthru
          _
        // Predicated region
        $region53: #{tpu_custom_call.1} parent=47 // pred_check
          %p420 = pneg %p118
        $region54: #{tpu_custom_call.1} parent=47 // pred_check_branch
          %422 = sbr.rel (%p420) target = $region56
        $region55: #{tpu_custom_call.1} parent=47 // pred_region
          %s423 = sand.u32 %s30, 1
          %s424 = scalar_lea.sflag [#allocation10], %s423
          %s425 = sand.u32 %s108, 1
          %s426 = smul.addr %s425, 16
          %s427 = scalar_lea.vmem [#allocation9], %s426
          %s429 = ssub.s32 256, 256
          %430 = vsyncadd %s424, %s429
          %s431 = smul.addr %s30, 2
          %s432 = smul.addr %s431, 128
          %s433 = scalar_lea.hbm %s3, %s432
          %s434 = sshll.u32 %s427, 4
          %s435 = int_to_ptr.vmem [resolvable:$true] %s434
          %440 = dma.hbm_to_vmem [thread:$0]  %s433, 256, %s435, %s424, 128, 128, 8
        $region56: #{tpu_custom_call.1} parent=47 // pred_fallthru
          _
        // Predicated region
        $region57: #{tpu_custom_call.1} parent=47 // pred_check
          %p441 = pneg %p144
        $region58: #{tpu_custom_call.1} parent=47 // pred_check_branch
          %443 = sbr.rel (%p441) target = $region60
        $region59: #{tpu_custom_call.1} parent=47 // pred_region
          %s444 = sand.u32 %s30, 1
          %s445 = scalar_lea.sflag [#allocation10], %s444
          %s446 = sand.u32 %s134, 1
          %s447 = smul.addr %s446, 16
          %s448 = scalar_lea.vmem [#allocation11], %s447
          %s450 = ssub.s32 256, 256
          %451 = vsyncadd %s445, %s450
          %s452 = smul.addr %s30, 2
          %s453 = smul.addr %s452, 128
          %s454 = scalar_lea.hbm %s4, %s453
          %s455 = sshll.u32 %s448, 4
          %s456 = int_to_ptr.vmem [resolvable:$true] %s455
          %461 = dma.hbm_to_vmem [thread:$0]  %s454, 256, %s456, %s445, 128, 128, 8
        $region60: #{tpu_custom_call.1} parent=47 // pred_fallthru
          _
      $region48: #{tpu_custom_call.1} parent=5 // pred_fallthru
        _
      %p462 = scmp.le.s32.totalorder 1, %s30
      %p463 = scmp.lt.s32.totalorder %s30, 3
      %p464 = pnand %p462, %p463
      %p465 = pneg %p464
      // Predicated region
      $region61: #{tpu_custom_call.1} parent=5 // pred_check
        _
      $region62: #{tpu_custom_call.1} parent=5 // pred_check_branch
        %467 = sbr.rel (%p464) target = $region64
      $region63: #{tpu_custom_call.1} parent=5 // pred_region
        %s468 = ssub.s32 %s30, 1
        // Predicated region
        $region65: #{tpu_custom_call.1} parent=63 // pred_check
          %p469 = pneg %p51
        $region66: #{tpu_custom_call.1} parent=63 // pred_check_branch
          %471 = sbr.rel (%p469) target = $region68
        $region67: #{tpu_custom_call.1} parent=63 // pred_region
          %472 = dma.done [#allocation5], 16
        $region68: #{tpu_custom_call.1} parent=63 // pred_fallthru
          _
        // Predicated region
        $region69: #{tpu_custom_call.1} parent=63 // pred_check
          %p473 = pneg %p72
        $region70: #{tpu_custom_call.1} parent=63 // pred_check_branch
          %475 = sbr.rel (%p473) target = $region72
        $region71: #{tpu_custom_call.1} parent=63 // pred_region
          %476 = dma.done [#allocation6], 16
        $region72: #{tpu_custom_call.1} parent=63 // pred_fallthru
          _
        %s477 = sand.u32 %s85, 1
        %s478 = scalar_lea.sflag [#allocation3], %s477
        %s479 = sand.u32 %s85, 1
        %s480 = smul.addr %s479, 16
        %s481 = scalar_lea.vmem [#allocation8], %s480
        // Predicated region
        $region73: #{tpu_custom_call.1} parent=63 // pred_check
          %p482 = pneg %p98
        $region74: #{tpu_custom_call.1} parent=63 // pred_check_branch
          %484 = sbr.rel (%p482) target = $region76
        $region75: #{tpu_custom_call.1} parent=63 // pred_region
          %485 = dma.done %s478, 256
        $region76: #{tpu_custom_call.1} parent=63 // pred_fallthru
          _
        %s486 = sand.u32 %s35, 1
        %s487 = scalar_lea.sflag [#allocation10], %s486
        %s488 = sand.u32 %s111, 1
        %s489 = smul.addr %s488, 16
        %s490 = scalar_lea.vmem [#allocation9], %s489
        // Predicated region
        $region77: #{tpu_custom_call.1} parent=63 // pred_check
          %p491 = pneg %p124
        $region78: #{tpu_custom_call.1} parent=63 // pred_check_branch
          %493 = sbr.rel (%p491) target = $region80
        $region79: #{tpu_custom_call.1} parent=63 // pred_region
          %494 = dma.done %s487, 256
        $region80: #{tpu_custom_call.1} parent=63 // pred_fallthru
          _
        %s495 = sand.u32 %s35, 1
        %s496 = scalar_lea.sflag [#allocation10], %s495
        %s497 = sand.u32 %s137, 1
        %s498 = smul.addr %s497, 16
        %s499 = scalar_lea.vmem [#allocation11], %s498
        // Predicated region
        $region81: #{tpu_custom_call.1} parent=63 // pred_check
          %p500 = pneg %p150
        $region82: #{tpu_custom_call.1} parent=63 // pred_check_branch
          %502 = sbr.rel (%p500) target = $region84
        $region83: #{tpu_custom_call.1} parent=63 // pred_region
          %503 = dma.done %s496, 256
        $region84: #{tpu_custom_call.1} parent=63 // pred_fallthru
          _
        // Predicated region
        $region85: #{tpu_custom_call.1} parent=63 // pred_check
          %p504 = pneg %p171
        $region86: #{tpu_custom_call.1} parent=63 // pred_check_branch
          %506 = sbr.rel (%p504) target = $region88
        $region87: #{tpu_custom_call.1} parent=63 // pred_region
          %507 = dma.done [#allocation13], 3072
        $region88: #{tpu_custom_call.1} parent=63 // pred_fallthru
          _
        // Predicated region
        $region89: #{tpu_custom_call.1} parent=63 // pred_check
          %p508 = pneg %p192
        $region90: #{tpu_custom_call.1} parent=63 // pred_check_branch
          %510 = sbr.rel (%p508) target = $region92
        $region91: #{tpu_custom_call.1} parent=63 // pred_region
          %511 = dma.done [#allocation13], 1024
        $region92: #{tpu_custom_call.1} parent=63 // pred_fallthru
          _
        // Predicated region
        $region93: #{tpu_custom_call.1} parent=63 // pred_check
          %p512 = pneg %p213
        $region94: #{tpu_custom_call.1} parent=63 // pred_check_branch
          %514 = sbr.rel (%p512) target = $region96
        $region95: #{tpu_custom_call.1} parent=63 // pred_region
          %515 = dma.done [#allocation16], 4096
        $region96: #{tpu_custom_call.1} parent=63 // pred_fallthru
          _
        // Predicated region
        $region97: #{tpu_custom_call.1} parent=63 // pred_check
          %p516 = pneg %p234
        $region98: #{tpu_custom_call.1} parent=63 // pred_check_branch
          %518 = sbr.rel (%p516) target = $region100
        $region99: #{tpu_custom_call.1} parent=63 // pred_region
          %519 = dma.done [#allocation16], 4096
        $region100: #{tpu_custom_call.1} parent=63 // pred_fallthru
          _
        %520 = sfence
        %p521 = pneg %p51
        %p522 = pneg %p48
        %p523 = pneg %p72
        %p524 = pneg %p69
        %s525 = sand.u32 %s85, 1
        %s526 = scalar_lea.sflag [#allocation3], %s525
        %s527 = sand.u32 %s85, 1
        %s528 = smul.addr %s527, 16
        %s529 = scalar_lea.vmem [#allocation8], %s528
        %p530 = pneg %p98
        %p531 = pneg %p95
        %s532 = sand.u32 %s35, 1
        %s533 = scalar_lea.sflag [#allocation10], %s532
        %s534 = sand.u32 %s111, 1
        %s535 = smul.addr %s534, 16
        %s536 = scalar_lea.vmem [#allocation9], %s535
        %p537 = pneg %p124
        %p538 = pneg %p121
        %s539 = sand.u32 %s35, 1
        %s540 = scalar_lea.sflag [#allocation10], %s539
        %s541 = sand.u32 %s137, 1
        %s542 = smul.addr %s541, 16
        %s543 = scalar_lea.vmem [#allocation11], %s542
        %p544 = pneg %p150
        %p545 = pneg %p147
        %p546 = pneg %p171
        %p547 = pneg %p168
        %p548 = pneg %p192
        %p549 = pneg %p189
        %p550 = pneg %p213
        %p551 = pneg %p210
        %p552 = pneg %p234
        %p553 = pneg %p231
        %p554 = pneg %p255
        %p555 = pneg %p252
        %p556 = pneg %p276
        %p557 = pneg %p273
        %p558 = pneg %p302
        %p559 = pneg %p299
        %s560 = sand.u32 %s289, 1
        %s561 = scalar_lea.sflag [#allocation4], %s560
        %s562 = sand.u32 %s289, 1
        %s563 = smul.addr %s562, 16
        %s564 = scalar_lea.vmem [#allocation18], %s563
        %s566 = sld [smem:[#allocation2]]
        %v567 = vld [vmem:[%s481] sm:$0xff]
        %v568 = vld [vmem:[%s481 + $0x8] sm:$0xff]
        %v569 = vstv %s566
        %v570 = vmul.f32 %v569, %v567
        %v571 = vmul.f32 %v569, %v568
        %s572 = sld [smem:[#allocation2 + $0x1]]
        %v573 = vld [vmem:[%s490] sm:$0xff]
        %v574 = vld [vmem:[%s490 + $0x8] sm:$0xff]
        %v575 = vstv %s572
        %v576 = vmul.f32 %v575, %v573
        %v577 = vmul.f32 %v575, %v574
        %v578 = vadd.f32 %v570, %v576
        %v579 = vadd.f32 %v571, %v577
        %v580 = vpack.c.bf16 %v579, %v578
        %v581 = vld [vmem:[#allocation12] sm:$0xff]
        %v582 = vld [vmem:[#allocation12 + $0x8] sm:$0xf]
        %v583 = vld [vmem:[#allocation12 + $0xc] sm:$0xff]
        %v584 = vld [vmem:[#allocation12 + $0x14] sm:$0xf]
        %v585 = vld [vmem:[#allocation12 + $0x18] sm:$0xff]
        %v586 = vld [vmem:[#allocation12 + $0x20] sm:$0xf]
        %v587 = vld [vmem:[#allocation12 + $0x24] sm:$0xff]
        %v588 = vld [vmem:[#allocation12 + $0x2c] sm:$0xf]
        %v589 = vld [vmem:[#allocation12 + $0x30] sm:$0xff]
        %v590 = vld [vmem:[#allocation12 + $0x38] sm:$0xf]
        %v591 = vld [vmem:[#allocation12 + $0x3c] sm:$0xff]
        %v592 = vld [vmem:[#allocation12 + $0x44] sm:$0xf]
        %v593 = vld [vmem:[#allocation12 + $0x48] sm:$0xff]
        %v594 = vld [vmem:[#allocation12 + $0x50] sm:$0xf]
        %v595 = vld [vmem:[#allocation12 + $0x54] sm:$0xff]
        %v596 = vld [vmem:[#allocation12 + $0x5c] sm:$0xf]
        %v597 = vld [vmem:[#allocation12 + $0x60] sm:$0xff]
        %v598 = vld [vmem:[#allocation12 + $0x68] sm:$0xf]
        %v599 = vld [vmem:[#allocation12 + $0x6c] sm:$0xff]
        %v600 = vld [vmem:[#allocation12 + $0x74] sm:$0xf]
        %v601 = vld [vmem:[#allocation12 + $0x78] sm:$0xff]
        %v602 = vld [vmem:[#allocation12 + $0x80] sm:$0xf]
        %v603 = vld [vmem:[#allocation12 + $0x84] sm:$0xff]
        %v604 = vld [vmem:[#allocation12 + $0x8c] sm:$0xf]
        %v605 = vld [vmem:[#allocation12 + $0x90] sm:$0xff]
        %v606 = vld [vmem:[#allocation12 + $0x98] sm:$0xf]
        %v607 = vld [vmem:[#allocation12 + $0x9c] sm:$0xff]
        %v608 = vld [vmem:[#allocation12 + $0xa4] sm:$0xf]
        %v609 = vld [vmem:[#allocation12 + $0xa8] sm:$0xff]
        %v610 = vld [vmem:[#allocation12 + $0xb0] sm:$0xf]
        %v611 = vld [vmem:[#allocation12 + $0xb4] sm:$0xff]
        %v612 = vld [vmem:[#allocation12 + $0xbc] sm:$0xf]
        %v645 = vunpack.c.l.b16 %v581
        %v646 = vunpack.c.h.b16 %v581
        %v647 = vunpack.c.l.b16 %v582
        %v648 = vunpack.c.l.b16 %v583
        %v649 = vunpack.c.h.b16 %v583
        %v650 = vunpack.c.l.b16 %v584
        %v651 = vunpack.c.l.b16 %v585
        %v652 = vunpack.c.h.b16 %v585
        %v653 = vunpack.c.l.b16 %v586
        %v654 = vunpack.c.l.b16 %v587
        %v655 = vunpack.c.h.b16 %v587
        %v656 = vunpack.c.l.b16 %v588
        %v657 = vunpack.c.l.b16 %v589
        %v658 = vunpack.c.h.b16 %v589
        %v659 = vunpack.c.l.b16 %v590
        %v660 = vunpack.c.l.b16 %v591
        %v661 = vunpack.c.h.b16 %v591
        %v662 = vunpack.c.l.b16 %v592
        %v663 = vunpack.c.l.b16 %v593
        %v664 = vunpack.c.h.b16 %v593
        %v665 = vunpack.c.l.b16 %v594
        %v666 = vunpack.c.l.b16 %v595
        %v667 = vunpack.c.h.b16 %v595
        %v668 = vunpack.c.l.b16 %v596
        %v669 = vunpack.c.l.b16 %v597
        %v670 = vunpack.c.h.b16 %v597
        %v671 = vunpack.c.l.b16 %v598
        %v672 = vunpack.c.l.b16 %v599
        %v673 = vunpack.c.h.b16 %v599
        %v674 = vunpack.c.l.b16 %v600
        %v675 = vunpack.c.l.b16 %v601
        %v676 = vunpack.c.h.b16 %v601
        %v677 = vunpack.c.l.b16 %v602
        %v678 = vunpack.c.l.b16 %v603
        %v679 = vunpack.c.h.b16 %v603
        %v680 = vunpack.c.l.b16 %v604
        %v681 = vunpack.c.l.b16 %v605
        %v682 = vunpack.c.h.b16 %v605
        %v683 = vunpack.c.l.b16 %v606
        %v684 = vunpack.c.l.b16 %v607
        %v685 = vunpack.c.h.b16 %v607
        %v686 = vunpack.c.l.b16 %v608
        %v687 = vunpack.c.l.b16 %v609
        %v688 = vunpack.c.h.b16 %v609
        %v689 = vunpack.c.l.b16 %v610
        %v690 = vunpack.c.l.b16 %v611
        %v691 = vunpack.c.h.b16 %v611
        %v692 = vunpack.c.l.b16 %v612
        %v693 = vpack.c.b16 %v648, %v645
        %v694 = vpack.c.b16 %v649, %v646
        %v695 = vpack.c.b16 %v650, %v647
        %v696 = vpack.c.b16 %v654, %v651
        %v697 = vpack.c.b16 %v655, %v652
        %v698 = vpack.c.b16 %v656, %v653
        %v699 = vpack.c.b16 %v660, %v657
        %v700 = vpack.c.b16 %v661, %v658
        %v701 = vpack.c.b16 %v662, %v659
        %v702 = vpack.c.b16 %v666, %v663
        %v703 = vpack.c.b16 %v667, %v664
        %v704 = vpack.c.b16 %v668, %v665
        %v705 = vpack.c.b16 %v672, %v669
        %v706 = vpack.c.b16 %v673, %v670
        %v707 = vpack.c.b16 %v674, %v671
        %v708 = vpack.c.b16 %v678, %v675
        %v709 = vpack.c.b16 %v679, %v676
        %v710 = vpack.c.b16 %v680, %v677
        %v711 = vpack.c.b16 %v684, %v681
        %v712 = vpack.c.b16 %v685, %v682
        %v713 = vpack.c.b16 %v686, %v683
        %v714 = vpack.c.b16 %v690, %v687
        %v715 = vpack.c.b16 %v691, %v688
        %v716 = vpack.c.b16 %v692, %v689
        %741 = vmatprep.subr.bf16.mxu0 %v694
        %742 = vmatpush1.bf16.msra.mxu0 %v693
        %743 = vmatprep.subr.bf16.mxu0 %v697
        %744 = vmatpush1.bf16.msra.mxu0 %v696
        %745 = vmatprep.subr.bf16.mxu0 %v700
        %746 = vmatpush1.bf16.msra.mxu0 %v699
        %747 = vmatprep.subr.bf16.mxu0 %v703
        %748 = vmatpush1.bf16.msra.mxu0 %v702
        %749 = vmatprep.subr.bf16.mxu0 %v706
        %750 = vmatpush1.bf16.msra.mxu0 %v705
        %751 = vmatprep.subr.bf16.mxu0 %v709
        %752 = vmatpush1.bf16.msra.mxu0 %v708
        %753 = vmatprep.subr.bf16.mxu0 %v712
        %754 = vmatpush1.bf16.msra.mxu0 %v711
        %755 = vmatprep.subr.bf16.mxu0 %v715
        %756 = vmatpush1.bf16.msra.mxu0 %v714
        %757 = vmatprep.subr.bf16.mxu0 0
        %758 = vmatpush1.bf16.msra.mxu0 0
        %759 = vmatprep.subr.bf16.mxu0 0
        %760 = vmatpush1.bf16.msra.mxu0 0
        %761 = vmatprep.subr.bf16.mxu0 0
        %762 = vmatpush1.bf16.msra.mxu0 0
        %763 = vmatprep.subr.bf16.mxu0 0
        %764 = vmatpush1.bf16.msra.mxu0 0
        %765 = vmatprep.subr.bf16.mxu0 0
        %766 = vmatpush1.bf16.msra.mxu0 0
        %767 = vmatprep.subr.bf16.mxu0 0
        %768 = vmatpush1.bf16.msra.mxu0 0
        %769 = vmatprep.subr.bf16.mxu0 0
        %770 = vmatpush1.bf16.msra.mxu0 0
        %771 = vmatprep.subr.bf16.mxu0 0
        %772 = vmatpush1.bf16.msra.mxu0 0
        %773 = vmatprep.mubr.bf16.mxu0 0
        %774 = vmatmul.mubr.bf16.gmra.mrb[0].mxu0 %v580
        %v775 = vpop.f32.mrb[0].mxu0
        %v776 = vadd.f32 0.0, %v775
        %v777 = vpop.f32.mrb[0].mxu0
        %v778 = vadd.f32 0.0, %v777
        %v779 = vpop.f32.mrb[0].mxu0
        %v780 = vadd.f32 0.0, %v779
        %v781 = vpop.f32.mrb[0].mxu0
        %v782 = vadd.f32 0.0, %v781
        %783 = vdwg.mxu0
        %784 = vmatprep.subr.bf16.mxu0 0
        %785 = vmatpush1.bf16.msra.mxu0 %v695
        %786 = vmatprep.subr.bf16.mxu0 0
        %787 = vmatpush1.bf16.msra.mxu0 %v698
        %788 = vmatprep.subr.bf16.mxu0 0
        %789 = vmatpush1.bf16.msra.mxu0 %v701
        %790 = vmatprep.subr.bf16.mxu0 0
        %791 = vmatpush1.bf16.msra.mxu0 %v704
        %792 = vmatprep.subr.bf16.mxu0 0
        %793 = vmatpush1.bf16.msra.mxu0 %v707
        %794 = vmatprep.subr.bf16.mxu0 0
        %795 = vmatpush1.bf16.msra.mxu0 %v710
        %796 = vmatprep.subr.bf16.mxu0 0
        %797 = vmatpush1.bf16.msra.mxu0 %v713
        %798 = vmatprep.subr.bf16.mxu0 0
        %799 = vmatpush1.bf16.msra.mxu0 %v716
        %800 = vmatprep.subr.bf16.mxu0 0
        %801 = vmatpush1.bf16.msra.mxu0 0
        %802 = vmatprep.subr.bf16.mxu0 0
        %803 = vmatpush1.bf16.msra.mxu0 0
        %804 = vmatprep.subr.bf16.mxu0 0
        %805 = vmatpush1.bf16.msra.mxu0 0
        %806 = vmatprep.subr.bf16.mxu0 0
        %807 = vmatpush1.bf16.msra.mxu0 0
        %808 = vmatprep.subr.bf16.mxu0 0
        %809 = vmatpush1.bf16.msra.mxu0 0
        %810 = vmatprep.subr.bf16.mxu0 0
        %811 = vmatpush1.bf16.msra.mxu0 0
        %812 = vmatprep.subr.bf16.mxu0 0
        %813 = vmatpush1.bf16.msra.mxu0 0
        %814 = vmatprep.subr.bf16.mxu0 0
        %815 = vmatpush1.bf16.msra.mxu0 0
        %816 = vmatprep.mubr.bf16.mxu0 0
        %817 = vmatmul.mubr.bf16.gmra.mrb[0].mxu0 %v580
        %v818 = vpop.f32.mrb[0].mxu0
        %v819 = vadd.f32 0.0, %v818
        %v820 = vpop.f32.mrb[0].mxu0
        %v821 = vpop.f32.mrb[0].mxu0
        %v822 = vadd.f32 0.0, %v821
        %v823 = vpop.f32.mrb[0].mxu0
        %824 = vdwg.mxu0
        %s825 = sld [smem:[#allocation7]]
        %v826 = vstv %s825
        %v827 = vmul.f32 %v826, %v819
        %v828 = vmul.f32 %v826, %v822
        %s829 = sld [smem:[#allocation7 + $0x1]]
        %v830 = vld [vmem:[%s499] sm:$0xff]
        %v831 = vld [vmem:[%s499 + $0x8] sm:$0xff]
        %v832 = vstv %s829
        %v833 = vmul.f32 %v832, %v830
        %v834 = vmul.f32 %v832, %v831
        %v835 = vadd.f32 %v827, %v833
        %v836 = vadd.f32 %v828, %v834
        %v837 = vpack.c.bf16 %v836, %v835
        %v838 = vlaneseq
        %v839 = vshrl.u32 %v838, 7
        %v840 = vadd.s32 %v839, 8
        %v841 = vlaneseq
        %v842 = vand.u32 %v841, 127
        %vm843 = vcmp.ge.s32.totalorder %v839, %v842
        %vm844 = vcmp.ge.s32.totalorder %v840, %v842
        %v845 = vmul.f32 %v776, %v776
        %v846 = vmul.f32 %v780, %v780
        %vm847 = vcmask 261120
        %v848 = vsel %vm847, %v845, 0.0
        %849 = vadd.xlane.f32.xlu0 %v848
        %v850 = vpop.xlane.xlu0 %849
        %v851 = vsel %vm847, %v846, 0.0
        %852 = vadd.xlane.f32.xlu0 %v851
        %v853 = vpop.xlane.xlu0 %852
        %v854 = vrsqrt.pop %v850
        %v855 = vmul.f32 %v850, %v854
        %vm856 = vcmp.eq.f32.partialorder %v850, inf
        %v857 = vsel %vm856, %v850, %v855
        %vm858 = vcmp.eq.f32.partialorder %v850, 0.0
        %v859 = vand.u32 %v850, 2147483648
        %v860 = vsel %vm858, %v859, %v857
        %v861 = vrsqrt.pop %v853
        %v862 = vmul.f32 %v853, %v861
        %vm863 = vcmp.eq.f32.partialorder %v853, inf
        %v864 = vsel %vm863, %v853, %v862
        %vm865 = vcmp.eq.f32.partialorder %v853, 0.0
        %v866 = vand.u32 %v853, 2147483648
        %v867 = vsel %vm865, %v866, %v864
        %v868 = vadd.f32 %v860, 1.1920929e-07
        %v869 = vadd.f32 %v867, 1.1920929e-07
        %v870 = vrcp.pop %v868
        %v871 = vmul.f32 %v776, %v870
        %v872 = vrcp.pop %v869
        %v873 = vmul.f32 %v780, %v872
        %v874 = vmul.f32 %v778, %v778
        %v875 = vmul.f32 %v782, %v782
        %v876 = vsel %vm847, %v874, 0.0
        %877 = vadd.xlane.f32.xlu0 %v876
        %v878 = vpop.xlane.xlu0 %877
        %v879 = vsel %vm847, %v875, 0.0
        %880 = vadd.xlane.f32.xlu0 %v879
        %v881 = vpop.xlane.xlu0 %880
        %v882 = vrsqrt.pop %v878
        %v883 = vmul.f32 %v878, %v882
        %vm884 = vcmp.eq.f32.partialorder %v878, inf
        %v885 = vsel %vm884, %v878, %v883
        %vm886 = vcmp.eq.f32.partialorder %v878, 0.0
        %v887 = vand.u32 %v878, 2147483648
        %v888 = vsel %vm886, %v887, %v885
        %v889 = vrsqrt.pop %v881
        %v890 = vmul.f32 %v881, %v889
        %vm891 = vcmp.eq.f32.partialorder %v881, inf
        %v892 = vsel %vm891, %v881, %v890
        %vm893 = vcmp.eq.f32.partialorder %v881, 0.0
        %v894 = vand.u32 %v881, 2147483648
        %v895 = vsel %vm893, %v894, %v892
        %v896 = vadd.f32 %v888, 1.1920929e-07
        %v897 = vadd.f32 %v895, 1.1920929e-07
        %v898 = vrcp.pop %v896
        %v899 = vmul.f32 %v778, %v898
        %v900 = vrcp.pop %v897
        %v901 = vmul.f32 %v782, %v900
        %v902 = vpack.c.bf16 %v873, %v871
        %v903 = vpack.c.bf16 %v901, %v899
        %v905 = vsel %vm847, %v902, 0
        %v908 = vsel %vm847, %v903, 0
        %910 = vmatprep.subr.bf16.mxu0 0
        %911 = vmatpush1.bf16.xpose.msra.mxu0 %v908
        %912 = vmatprep.subr.bf16.mxu0 0
        %913 = vmatpush1.bf16.xpose.msra.mxu0 0
        %914 = vmatprep.subr.bf16.mxu0 0
        %915 = vmatpush1.bf16.xpose.msra.mxu0 0
        %916 = vmatprep.subr.bf16.mxu0 0
        %917 = vmatpush1.bf16.xpose.msra.mxu0 0
        %918 = vmatprep.subr.bf16.mxu0 0
        %919 = vmatpush1.bf16.xpose.msra.mxu0 0
        %920 = vmatprep.subr.bf16.mxu0 0
        %921 = vmatpush1.bf16.xpose.msra.mxu0 0
        %922 = vmatprep.subr.bf16.mxu0 0
        %923 = vmatpush1.bf16.xpose.msra.mxu0 0
        %924 = vmatprep.subr.bf16.mxu0 0
        %925 = vmatpush1.bf16.xpose.msra.mxu0 0
        %926 = vmatprep.subr.bf16.mxu0 0
        %927 = vmatpush1.bf16.xpose.msra.mxu0 0
        %928 = vmatprep.subr.bf16.mxu0 0
        %929 = vmatpush1.bf16.xpose.msra.mxu0 0
        %930 = vmatprep.subr.bf16.mxu0 0
        %931 = vmatpush1.bf16.xpose.msra.mxu0 0
        %932 = vmatprep.subr.bf16.mxu0 0
        %933 = vmatpush1.bf16.xpose.msra.mxu0 0
        %934 = vmatprep.subr.bf16.mxu0 0
        %935 = vmatpush1.bf16.xpose.msra.mxu0 0
        %936 = vmatprep.subr.bf16.mxu0 0
        %937 = vmatpush1.bf16.xpose.msra.mxu0 0
        %938 = vmatprep.subr.bf16.mxu0 0
        %939 = vmatpush1.bf16.xpose.msra.mxu0 0
        %940 = vmatprep.subr.bf16.mxu0 0
        %941 = vmatpush1.bf16.xpose.msra.mxu0 0
        %942 = vmatprep.mubr.bf16.mxu0 0
        %943 = vmatmul.mubr.bf16.gmra.mrb[0].mxu0 %v905
        %v944 = vpop.f32.mrb[0].mxu0
        %v945 = vadd.f32 0.0, %v944
        %v946 = vpop.f32.mrb[0].mxu0
        %v947 = vpop.f32.mrb[0].mxu0
        %v948 = vadd.f32 0.0, %v947
        %v949 = vpop.f32.mrb[0].mxu0
        %950 = vdwg.mxu0
        %v951 = vmul.f32 %v945, 11.313708
        %v952 = vmul.f32 %v948, 11.313708
        %v953 = vsel %vm843, %v951, -1e+30
        %v954 = vsel %vm844, %v952, -1e+30
        %vm955 = vcmask 130048
        %v956 = vsel %vm955, %v953, -inf
        %957 = vmax.xlane.f32.xlu0 %v956
        %v958 = vpop.xlane.xlu0 %957
        %v959 = vsel %vm955, %v954, -inf
        %960 = vmax.xlane.f32.xlu0 %v959
        %v961 = vpop.xlane.xlu0 %960
        %v962 = vsub.f32 %v953, %v958
        %v963 = vsub.f32 %v954, %v961
        %v964 = vmul.f32 %v962, 1.442695
        %v965 = vpow.pop %v964
        %v966 = vmul.f32 %v963, 1.442695
        %v967 = vpow.pop %v966
        %v968 = vsel %vm955, %v965, 0.0
        %969 = vadd.xlane.f32.xlu0 %v968
        %v970 = vpop.xlane.xlu0 %969
        %v971 = vsel %vm955, %v967, 0.0
        %972 = vadd.xlane.f32.xlu0 %v971
        %v973 = vpop.xlane.xlu0 %972
        %v974 = vrcp.pop %v970
        %v975 = vrcp.pop %v973
        %v976 = vmul.f32 %v965, %v974
        %v977 = vmul.f32 %v967, %v975
        %v978 = vpack.c.bf16 %v977, %v976
        %v980 = vsel %vm955, %v978, 0
        %982 = vmatprep.subr.bf16.mxu0 0
        %983 = vmatpush1.bf16.msra.mxu0 %v837
        %984 = vmatprep.subr.bf16.mxu0 0
        %985 = vmatpush1.bf16.msra.mxu0 0
        %986 = vmatprep.subr.bf16.mxu0 0
        %987 = vmatpush1.bf16.msra.mxu0 0
        %988 = vmatprep.subr.bf16.mxu0 0
        %989 = vmatpush1.bf16.msra.mxu0 0
        %990 = vmatprep.subr.bf16.mxu0 0
        %991 = vmatpush1.bf16.msra.mxu0 0
        %992 = vmatprep.subr.bf16.mxu0 0
        %993 = vmatpush1.bf16.msra.mxu0 0
        %994 = vmatprep.subr.bf16.mxu0 0
        %995 = vmatpush1.bf16.msra.mxu0 0
        %996 = vmatprep.subr.bf16.mxu0 0
        %997 = vmatpush1.bf16.msra.mxu0 0
        %998 = vmatprep.subr.bf16.mxu0 0
        %999 = vmatpush1.bf16.msra.mxu0 0
        %1000 = vmatprep.subr.bf16.mxu0 0
        %1001 = vmatpush1.bf16.msra.mxu0 0
        %1002 = vmatprep.subr.bf16.mxu0 0
        %1003 = vmatpush1.bf16.msra.mxu0 0
        %1004 = vmatprep.subr.bf16.mxu0 0
        %1005 = vmatpush1.bf16.msra.mxu0 0
        %1006 = vmatprep.subr.bf16.mxu0 0
        %1007 = vmatpush1.bf16.msra.mxu0 0
        %1008 = vmatprep.subr.bf16.mxu0 0
        %1009 = vmatpush1.bf16.msra.mxu0 0
        %1010 = vmatprep.subr.bf16.mxu0 0
        %1011 = vmatpush1.bf16.msra.mxu0 0
        %1012 = vmatprep.subr.bf16.mxu0 0
        %1013 = vmatpush1.bf16.msra.mxu0 0
        %1014 = vmatprep.mubr.bf16.mxu0 0
        %1015 = vmatmul.mubr.bf16.gmra.mrb[0].mxu0 %v980
        %v1016 = vpop.f32.mrb[0].mxu0
        %v1017 = vadd.f32 0.0, %v1016
        %v1018 = vpop.f32.mrb[0].mxu0
        %v1019 = vpop.f32.mrb[0].mxu0
        %v1020 = vadd.f32 0.0, %v1019
        %v1021 = vpop.f32.mrb[0].mxu0
        %1022 = vdwg.mxu0
        %1025 = vrot.lane.b32.xlu0 %v845, 96
        %v1026 = vpop.permute.xlu0 %1025
        %1027 = vrot.lane.b32.xlu0 %v846, 96
        %v1028 = vpop.permute.xlu0 %1027
        %v1031 = vsel %vm847, %v1026, 0.0
        %1032 = vadd.xlane.f32.xlu0 %v1031
        %v1033 = vpop.xlane.xlu0 %1032
        %v1034 = vsel %vm847, %v1028, 0.0
        %1035 = vadd.xlane.f32.xlu0 %v1034
        %v1036 = vpop.xlane.xlu0 %1035
        %v1037 = vrsqrt.pop %v1033
        %v1038 = vmul.f32 %v1033, %v1037
        %vm1039 = vcmp.eq.f32.partialorder %v1033, inf
        %v1040 = vsel %vm1039, %v1033, %v1038
        %vm1041 = vcmp.eq.f32.partialorder %v1033, 0.0
        %v1042 = vand.u32 %v1033, 2147483648
        %v1043 = vsel %vm1041, %v1042, %v1040
        %v1044 = vrsqrt.pop %v1036
        %v1045 = vmul.f32 %v1036, %v1044
        %vm1046 = vcmp.eq.f32.partialorder %v1036, inf
        %v1047 = vsel %vm1046, %v1036, %v1045
        %vm1048 = vcmp.eq.f32.partialorder %v1036, 0.0
        %v1049 = vand.u32 %v1036, 2147483648
        %v1050 = vsel %vm1048, %v1049, %v1047
        %v1051 = vadd.f32 %v1043, 1.1920929e-07
        %v1052 = vadd.f32 %v1050, 1.1920929e-07
        %v1053 = vrcp.pop %v1051
        %v1054 = vmul.f32 %v776, %v1053
        %v1055 = vrcp.pop %v1052
        %v1056 = vmul.f32 %v780, %v1055
        %1059 = vrot.lane.b32.xlu0 %v874, 96
        %v1060 = vpop.permute.xlu0 %1059
        %1061 = vrot.lane.b32.xlu0 %v875, 96
        %v1062 = vpop.permute.xlu0 %1061
        %v1065 = vsel %vm847, %v1060, 0.0
        %1066 = vadd.xlane.f32.xlu0 %v1065
        %v1067 = vpop.xlane.xlu0 %1066
        %v1068 = vsel %vm847, %v1062, 0.0
        %1069 = vadd.xlane.f32.xlu0 %v1068
        %v1070 = vpop.xlane.xlu0 %1069
        %v1071 = vrsqrt.pop %v1067
        %v1072 = vmul.f32 %v1067, %v1071
        %vm1073 = vcmp.eq.f32.partialorder %v1067, inf
        %v1074 = vsel %vm1073, %v1067, %v1072
        %vm1075 = vcmp.eq.f32.partialorder %v1067, 0.0
        %v1076 = vand.u32 %v1067, 2147483648
        %v1077 = vsel %vm1075, %v1076, %v1074
        %v1078 = vrsqrt.pop %v1070
        %v1079 = vmul.f32 %v1070, %v1078
        %vm1080 = vcmp.eq.f32.partialorder %v1070, inf
        %v1081 = vsel %vm1080, %v1070, %v1079
        %vm1082 = vcmp.eq.f32.partialorder %v1070, 0.0
        %v1083 = vand.u32 %v1070, 2147483648
        %v1084 = vsel %vm1082, %v1083, %v1081
        %v1085 = vadd.f32 %v1077, 1.1920929e-07
        %v1086 = vadd.f32 %v1084, 1.1920929e-07
        %v1087 = vrcp.pop %v1085
        %v1088 = vmul.f32 %v778, %v1087
        %v1089 = vrcp.pop %v1086
        %v1090 = vmul.f32 %v782, %v1089
        %v1091 = vpack.c.bf16 %v1056, %v1054
        %v1092 = vpack.c.bf16 %v1090, %v1088
        %1094 = vrot.lane.b32.xlu0 %v1091, 96
        %v1095 = vpop.permute.xlu0 %1094
        %1097 = vrot.lane.b32.xlu0 %v1092, 96
        %v1098 = vpop.permute.xlu0 %1097
        %v1100 = vsel %vm847, %v1095, 0
        %v1103 = vsel %vm847, %v1098, 0
        %1105 = vmatprep.subr.bf16.mxu0 0
        %1106 = vmatpush1.bf16.xpose.msra.mxu0 %v1103
        %1107 = vmatprep.subr.bf16.mxu0 0
        %1108 = vmatpush1.bf16.xpose.msra.mxu0 0
        %1109 = vmatprep.subr.bf16.mxu0 0
        %1110 = vmatpush1.bf16.xpose.msra.mxu0 0
        %1111 = vmatprep.subr.bf16.mxu0 0
        %1112 = vmatpush1.bf16.xpose.msra.mxu0 0
        %1113 = vmatprep.subr.bf16.mxu0 0
        %1114 = vmatpush1.bf16.xpose.msra.mxu0 0
        %1115 = vmatprep.subr.bf16.mxu0 0
        %1116 = vmatpush1.bf16.xpose.msra.mxu0 0
        %1117 = vmatprep.subr.bf16.mxu0 0
        %1118 = vmatpush1.bf16.xpose.msra.mxu0 0
        %1119 = vmatprep.subr.bf16.mxu0 0
        %1120 = vmatpush1.bf16.xpose.msra.mxu0 0
        %1121 = vmatprep.subr.bf16.mxu0 0
        %1122 = vmatpush1.bf16.xpose.msra.mxu0 0
        %1123 = vmatprep.subr.bf16.mxu0 0
        %1124 = vmatpush1.bf16.xpose.msra.mxu0 0
        %1125 = vmatprep.subr.bf16.mxu0 0
        %1126 = vmatpush1.bf16.xpose.msra.mxu0 0
        %1127 = vmatprep.subr.bf16.mxu0 0
        %1128 = vmatpush1.bf16.xpose.msra.mxu0 0
        %1129 = vmatprep.subr.bf16.mxu0 0
        %1130 = vmatpush1.bf16.xpose.msra.mxu0 0
        %1131 = vmatprep.subr.bf16.mxu0 0
        %1132 = vmatpush1.bf16.xpose.msra.mxu0 0
        %1133 = vmatprep.subr.bf16.mxu0 0
        %1134 = vmatpush1.bf16.xpose.msra.mxu0 0
        %1135 = vmatprep.subr.bf16.mxu0 0
        %1136 = vmatpush1.bf16.xpose.msra.mxu0 0
        %1137 = vmatprep.mubr.bf16.mxu0 0
        %1138 = vmatmul.mubr.bf16.gmra.mrb[0].mxu0 %v1100
        %v1139 = vpop.f32.mrb[0].mxu0
        %v1140 = vadd.f32 0.0, %v1139
        %v1141 = vpop.f32.mrb[0].mxu0
        %v1142 = vpop.f32.mrb[0].mxu0
        %v1143 = vadd.f32 0.0, %v1142
        %v1144 = vpop.f32.mrb[0].mxu0
        %1145 = vdwg.mxu0
        %v1146 = vmul.f32 %v1140, 11.313708
        %v1147 = vmul.f32 %v1143, 11.313708
        %v1148 = vsel %vm843, %v1146, -1e+30
        %v1149 = vsel %vm844, %v1147, -1e+30
        %v1150 = vsel %vm955, %v1148, -inf
        %1151 = vmax.xlane.f32.xlu0 %v1150
        %v1152 = vpop.xlane.xlu0 %1151
        %v1153 = vsel %vm955, %v1149, -inf
        %1154 = vmax.xlane.f32.xlu0 %v1153
        %v1155 = vpop.xlane.xlu0 %1154
        %v1156 = vsub.f32 %v1148, %v1152
        %v1157 = vsub.f32 %v1149, %v1155
        %v1158 = vmul.f32 %v1156, 1.442695
        %v1159 = vpow.pop %v1158
        %v1160 = vmul.f32 %v1157, 1.442695
        %v1161 = vpow.pop %v1160
        %v1162 = vsel %vm955, %v1159, 0.0
        %1163 = vadd.xlane.f32.xlu0 %v1162
        %v1164 = vpop.xlane.xlu0 %1163
        %v1165 = vsel %vm955, %v1161, 0.0
        %1166 = vadd.xlane.f32.xlu0 %v1165
        %v1167 = vpop.xlane.xlu0 %1166
        %v1168 = vrcp.pop %v1164
        %v1169 = vrcp.pop %v1167
        %v1170 = vmul.f32 %v1159, %v1168
        %v1171 = vmul.f32 %v1161, %v1169
        %v1172 = vpack.c.bf16 %v1171, %v1170
        %1174 = vrot.lane.b32.xlu0 %v837, 96
        %v1175 = vpop.permute.xlu0 %1174
        %v1178 = vsel %vm955, %v1172, 0
        %1180 = vmatprep.subr.bf16.mxu0 0
        %1181 = vmatpush1.bf16.msra.mxu0 %v1175
        %1182 = vmatprep.subr.bf16.mxu0 0
        %1183 = vmatpush1.bf16.msra.mxu0 0
        %1184 = vmatprep.subr.bf16.mxu0 0
        %1185 = vmatpush1.bf16.msra.mxu0 0
        %1186 = vmatprep.subr.bf16.mxu0 0
        %1187 = vmatpush1.bf16.msra.mxu0 0
        %1188 = vmatprep.subr.bf16.mxu0 0
        %1189 = vmatpush1.bf16.msra.mxu0 0
        %1190 = vmatprep.subr.bf16.mxu0 0
        %1191 = vmatpush1.bf16.msra.mxu0 0
        %1192 = vmatprep.subr.bf16.mxu0 0
        %1193 = vmatpush1.bf16.msra.mxu0 0
        %1194 = vmatprep.subr.bf16.mxu0 0
        %1195 = vmatpush1.bf16.msra.mxu0 0
        %1196 = vmatprep.subr.bf16.mxu0 0
        %1197 = vmatpush1.bf16.msra.mxu0 0
        %1198 = vmatprep.subr.bf16.mxu0 0
        %1199 = vmatpush1.bf16.msra.mxu0 0
        %1200 = vmatprep.subr.bf16.mxu0 0
        %1201 = vmatpush1.bf16.msra.mxu0 0
        %1202 = vmatprep.subr.bf16.mxu0 0
        %1203 = vmatpush1.bf16.msra.mxu0 0
        %1204 = vmatprep.subr.bf16.mxu0 0
        %1205 = vmatpush1.bf16.msra.mxu0 0
        %1206 = vmatprep.subr.bf16.mxu0 0
        %1207 = vmatpush1.bf16.msra.mxu0 0
        %1208 = vmatprep.subr.bf16.mxu0 0
        %1209 = vmatpush1.bf16.msra.mxu0 0
        %1210 = vmatprep.subr.bf16.mxu0 0
        %1211 = vmatpush1.bf16.msra.mxu0 0
        %1212 = vmatprep.mubr.bf16.mxu0 0
        %1213 = vmatmul.mubr.bf16.gmra.mrb[0].mxu0 %v1178
        %v1214 = vpop.f32.mrb[0].mxu0
        %v1215 = vadd.f32 0.0, %v1214
        %v1216 = vpop.f32.mrb[0].mxu0
        %v1217 = vpop.f32.mrb[0].mxu0
        %v1218 = vadd.f32 0.0, %v1217
        %v1219 = vpop.f32.mrb[0].mxu0
        %1220 = vdwg.mxu0
        %1221 = vrot.lane.b32.xlu0 %v845, 64
        %v1222 = vpop.permute.xlu0 %1221
        %1223 = vrot.lane.b32.xlu0 %v846, 64
        %v1224 = vpop.permute.xlu0 %1223
        %v1227 = vsel %vm847, %v1222, 0.0
        %1228 = vadd.xlane.f32.xlu0 %v1227
        %v1229 = vpop.xlane.xlu0 %1228
        %v1230 = vsel %vm847, %v1224, 0.0
        %1231 = vadd.xlane.f32.xlu0 %v1230
        %v1232 = vpop.xlane.xlu0 %1231
        %v1233 = vrsqrt.pop %v1229
        %v1234 = vmul.f32 %v1229, %v1233
        %vm1235 = vcmp.eq.f32.partialorder %v1229, inf
        %v1236 = vsel %vm1235, %v1229, %v1234
        %vm1237 = vcmp.eq.f32.partialorder %v1229, 0.0
        %v1238 = vand.u32 %v1229, 2147483648
        %v1239 = vsel %vm1237, %v1238, %v1236
        %v1240 = vrsqrt.pop %v1232
        %v1241 = vmul.f32 %v1232, %v1240
        %vm1242 = vcmp.eq.f32.partialorder %v1232, inf
        %v1243 = vsel %vm1242, %v1232, %v1241
        %vm1244 = vcmp.eq.f32.partialorder %v1232, 0.0
        %v1245 = vand.u32 %v1232, 2147483648
        %v1246 = vsel %vm1244, %v1245, %v1243
        %v1247 = vadd.f32 %v1239, 1.1920929e-07
        %v1248 = vadd.f32 %v1246, 1.1920929e-07
        %v1249 = vrcp.pop %v1247
        %v1250 = vmul.f32 %v776, %v1249
        %v1251 = vrcp.pop %v1248
        %v1252 = vmul.f32 %v780, %v1251
        %1253 = vrot.lane.b32.xlu0 %v874, 64
        %v1254 = vpop.permute.xlu0 %1253
        %1255 = vrot.lane.b32.xlu0 %v875, 64
        %v1256 = vpop.permute.xlu0 %1255
        %v1259 = vsel %vm847, %v1254, 0.0
        %1260 = vadd.xlane.f32.xlu0 %v1259
        %v1261 = vpop.xlane.xlu0 %1260
        %v1262 = vsel %vm847, %v1256, 0.0
        %1263 = vadd.xlane.f32.xlu0 %v1262
        %v1264 = vpop.xlane.xlu0 %1263
        %v1265 = vrsqrt.pop %v1261
        %v1266 = vmul.f32 %v1261, %v1265
        %vm1267 = vcmp.eq.f32.partialorder %v1261, inf
        %v1268 = vsel %vm1267, %v1261, %v1266
        %vm1269 = vcmp.eq.f32.partialorder %v1261, 0.0
        %v1270 = vand.u32 %v1261, 2147483648
        %v1271 = vsel %vm1269, %v1270, %v1268
        %v1272 = vrsqrt.pop %v1264
        %v1273 = vmul.f32 %v1264, %v1272
        %vm1274 = vcmp.eq.f32.partialorder %v1264, inf
        %v1275 = vsel %vm1274, %v1264, %v1273
        %vm1276 = vcmp.eq.f32.partialorder %v1264, 0.0
        %v1277 = vand.u32 %v1264, 2147483648
        %v1278 = vsel %vm1276, %v1277, %v1275
        %v1279 = vadd.f32 %v1271, 1.1920929e-07
        %v1280 = vadd.f32 %v1278, 1.1920929e-07
        %v1281 = vrcp.pop %v1279
        %v1282 = vmul.f32 %v778, %v1281
        %v1283 = vrcp.pop %v1280
        %v1284 = vmul.f32 %v782, %v1283
        %v1285 = vpack.c.bf16 %v1252, %v1250
        %v1286 = vpack.c.bf16 %v1284, %v1282
        %1288 = vrot.lane.b32.xlu0 %v1285, 64
        %v1289 = vpop.permute.xlu0 %1288
        %1291 = vrot.lane.b32.xlu0 %v1286, 64
        %v1292 = vpop.permute.xlu0 %1291
        %v1294 = vsel %vm847, %v1289, 0
        %v1297 = vsel %vm847, %v1292, 0
        %1299 = vmatprep.subr.bf16.mxu0 0
        %1300 = vmatpush1.bf16.xpose.msra.mxu0 %v1297
        %1301 = vmatprep.subr.bf16.mxu0 0
        %1302 = vmatpush1.bf16.xpose.msra.mxu0 0
        %1303 = vmatprep.subr.bf16.mxu0 0
        %1304 = vmatpush1.bf16.xpose.msra.mxu0 0
        %1305 = vmatprep.subr.bf16.mxu0 0
        %1306 = vmatpush1.bf16.xpose.msra.mxu0 0
        %1307 = vmatprep.subr.bf16.mxu0 0
        %1308 = vmatpush1.bf16.xpose.msra.mxu0 0
        %1309 = vmatprep.subr.bf16.mxu0 0
        %1310 = vmatpush1.bf16.xpose.msra.mxu0 0
        %1311 = vmatprep.subr.bf16.mxu0 0
        %1312 = vmatpush1.bf16.xpose.msra.mxu0 0
        %1313 = vmatprep.subr.bf16.mxu0 0
        %1314 = vmatpush1.bf16.xpose.msra.mxu0 0
        %1315 = vmatprep.subr.bf16.mxu0 0
        %1316 = vmatpush1.bf16.xpose.msra.mxu0 0
        %1317 = vmatprep.subr.bf16.mxu0 0
        %1318 = vmatpush1.bf16.xpose.msra.mxu0 0
        %1319 = vmatprep.subr.bf16.mxu0 0
        %1320 = vmatpush1.bf16.xpose.msra.mxu0 0
        %1321 = vmatprep.subr.bf16.mxu0 0
        %1322 = vmatpush1.bf16.xpose.msra.mxu0 0
        %1323 = vmatprep.subr.bf16.mxu0 0
        %1324 = vmatpush1.bf16.xpose.msra.mxu0 0
        %1325 = vmatprep.subr.bf16.mxu0 0
        %1326 = vmatpush1.bf16.xpose.msra.mxu0 0
        %1327 = vmatprep.subr.bf16.mxu0 0
        %1328 = vmatpush1.bf16.xpose.msra.mxu0 0
        %1329 = vmatprep.subr.bf16.mxu0 0
        %1330 = vmatpush1.bf16.xpose.msra.mxu0 0
        %1331 = vmatprep.mubr.bf16.mxu0 0
        %1332 = vmatmul.mubr.bf16.gmra.mrb[0].mxu0 %v1294
        %v1333 = vpop.f32.mrb[0].mxu0
        %v1334 = vadd.f32 0.0, %v1333
        %v1335 = vpop.f32.mrb[0].mxu0
        %v1336 = vpop.f32.mrb[0].mxu0
        %v1337 = vadd.f32 0.0, %v1336
        %v1338 = vpop.f32.mrb[0].mxu0
        %1339 = vdwg.mxu0
        %v1340 = vmul.f32 %v1334, 11.313708
        %v1341 = vmul.f32 %v1337, 11.313708
        %v1342 = vsel %vm843, %v1340, -1e+30
        %v1343 = vsel %vm844, %v1341, -1e+30
        %v1344 = vsel %vm955, %v1342, -inf
        %1345 = vmax.xlane.f32.xlu0 %v1344
        %v1346 = vpop.xlane.xlu0 %1345
        %v1347 = vsel %vm955, %v1343, -inf
        %1348 = vmax.xlane.f32.xlu0 %v1347
        %v1349 = vpop.xlane.xlu0 %1348
        %v1350 = vsub.f32 %v1342, %v1346
        %v1351 = vsub.f32 %v1343, %v1349
        %v1352 = vmul.f32 %v1350, 1.442695
        %v1353 = vpow.pop %v1352
        %v1354 = vmul.f32 %v1351, 1.442695
        %v1355 = vpow.pop %v1354
        %v1356 = vsel %vm955, %v1353, 0.0
        %1357 = vadd.xlane.f32.xlu0 %v1356
        %v1358 = vpop.xlane.xlu0 %1357
        %v1359 = vsel %vm955, %v1355, 0.0
        %1360 = vadd.xlane.f32.xlu0 %v1359
        %v1361 = vpop.xlane.xlu0 %1360
        %v1362 = vrcp.pop %v1358
        %v1363 = vrcp.pop %v1361
        %v1364 = vmul.f32 %v1353, %v1362
        %v1365 = vmul.f32 %v1355, %v1363
        %v1366 = vpack.c.bf16 %v1365, %v1364
        %1367 = vrot.lane.b32.xlu0 %v837, 64
        %v1368 = vpop.permute.xlu0 %1367
        %v1371 = vsel %vm955, %v1366, 0
        %1373 = vmatprep.subr.bf16.mxu0 0
        %1374 = vmatpush1.bf16.msra.mxu0 %v1368
        %1375 = vmatprep.subr.bf16.mxu0 0
        %1376 = vmatpush1.bf16.msra.mxu0 0
        %1377 = vmatprep.subr.bf16.mxu0 0
        %1378 = vmatpush1.bf16.msra.mxu0 0
        %1379 = vmatprep.subr.bf16.mxu0 0
        %1380 = vmatpush1.bf16.msra.mxu0 0
        %1381 = vmatprep.subr.bf16.mxu0 0
        %1382 = vmatpush1.bf16.msra.mxu0 0
        %1383 = vmatprep.subr.bf16.mxu0 0
        %1384 = vmatpush1.bf16.msra.mxu0 0
        %1385 = vmatprep.subr.bf16.mxu0 0
        %1386 = vmatpush1.bf16.msra.mxu0 0
        %1387 = vmatprep.subr.bf16.mxu0 0
        %1388 = vmatpush1.bf16.msra.mxu0 0
        %1389 = vmatprep.subr.bf16.mxu0 0
        %1390 = vmatpush1.bf16.msra.mxu0 0
        %1391 = vmatprep.subr.bf16.mxu0 0
        %1392 = vmatpush1.bf16.msra.mxu0 0
        %1393 = vmatprep.subr.bf16.mxu0 0
        %1394 = vmatpush1.bf16.msra.mxu0 0
        %1395 = vmatprep.subr.bf16.mxu0 0
        %1396 = vmatpush1.bf16.msra.mxu0 0
        %1397 = vmatprep.subr.bf16.mxu0 0
        %1398 = vmatpush1.bf16.msra.mxu0 0
        %1399 = vmatprep.subr.bf16.mxu0 0
        %1400 = vmatpush1.bf16.msra.mxu0 0
        %1401 = vmatprep.subr.bf16.mxu0 0
        %1402 = vmatpush1.bf16.msra.mxu0 0
        %1403 = vmatprep.subr.bf16.mxu0 0
        %1404 = vmatpush1.bf16.msra.mxu0 0
        %1405 = vmatprep.mubr.bf16.mxu0 0
        %1406 = vmatmul.mubr.bf16.gmra.mrb[0].mxu0 %v1371
        %v1407 = vpop.f32.mrb[0].mxu0
        %v1408 = vadd.f32 0.0, %v1407
        %v1409 = vpop.f32.mrb[0].mxu0
        %v1410 = vpop.f32.mrb[0].mxu0
        %v1411 = vadd.f32 0.0, %v1410
        %v1412 = vpop.f32.mrb[0].mxu0
        %1413 = vdwg.mxu0
        %1414 = vrot.lane.b32.xlu0 %v845, 32
        %v1415 = vpop.permute.xlu0 %1414
        %1416 = vrot.lane.b32.xlu0 %v846, 32
        %v1417 = vpop.permute.xlu0 %1416
        %v1420 = vsel %vm847, %v1415, 0.0
        %1421 = vadd.xlane.f32.xlu0 %v1420
        %v1422 = vpop.xlane.xlu0 %1421
        %v1423 = vsel %vm847, %v1417, 0.0
        %1424 = vadd.xlane.f32.xlu0 %v1423
        %v1425 = vpop.xlane.xlu0 %1424
        %v1426 = vrsqrt.pop %v1422
        %v1427 = vmul.f32 %v1422, %v1426
        %vm1428 = vcmp.eq.f32.partialorder %v1422, inf
        %v1429 = vsel %vm1428, %v1422, %v1427
        %vm1430 = vcmp.eq.f32.partialorder %v1422, 0.0
        %v1431 = vand.u32 %v1422, 2147483648
        %v1432 = vsel %vm1430, %v1431, %v1429
        %v1433 = vrsqrt.pop %v1425
        %v1434 = vmul.f32 %v1425, %v1433
        %vm1435 = vcmp.eq.f32.partialorder %v1425, inf
        %v1436 = vsel %vm1435, %v1425, %v1434
        %vm1437 = vcmp.eq.f32.partialorder %v1425, 0.0
        %v1438 = vand.u32 %v1425, 2147483648
        %v1439 = vsel %vm1437, %v1438, %v1436
        %v1440 = vadd.f32 %v1432, 1.1920929e-07
        %v1441 = vadd.f32 %v1439, 1.1920929e-07
        %v1442 = vrcp.pop %v1440
        %v1443 = vmul.f32 %v776, %v1442
        %v1444 = vrcp.pop %v1441
        %v1445 = vmul.f32 %v780, %v1444
        %1446 = vrot.lane.b32.xlu0 %v874, 32
        %v1447 = vpop.permute.xlu0 %1446
        %1448 = vrot.lane.b32.xlu0 %v875, 32
        %v1449 = vpop.permute.xlu0 %1448
        %v1452 = vsel %vm847, %v1447, 0.0
        %1453 = vadd.xlane.f32.xlu0 %v1452
        %v1454 = vpop.xlane.xlu0 %1453
        %v1455 = vsel %vm847, %v1449, 0.0
        %1456 = vadd.xlane.f32.xlu0 %v1455
        %v1457 = vpop.xlane.xlu0 %1456
        %v1458 = vrsqrt.pop %v1454
        %v1459 = vmul.f32 %v1454, %v1458
        %vm1460 = vcmp.eq.f32.partialorder %v1454, inf
        %v1461 = vsel %vm1460, %v1454, %v1459
        %vm1462 = vcmp.eq.f32.partialorder %v1454, 0.0
        %v1463 = vand.u32 %v1454, 2147483648
        %v1464 = vsel %vm1462, %v1463, %v1461
        %v1465 = vrsqrt.pop %v1457
        %v1466 = vmul.f32 %v1457, %v1465
        %vm1467 = vcmp.eq.f32.partialorder %v1457, inf
        %v1468 = vsel %vm1467, %v1457, %v1466
        %vm1469 = vcmp.eq.f32.partialorder %v1457, 0.0
        %v1470 = vand.u32 %v1457, 2147483648
        %v1471 = vsel %vm1469, %v1470, %v1468
        %v1472 = vadd.f32 %v1464, 1.1920929e-07
        %v1473 = vadd.f32 %v1471, 1.1920929e-07
        %v1474 = vrcp.pop %v1472
        %v1475 = vmul.f32 %v778, %v1474
        %v1476 = vrcp.pop %v1473
        %v1477 = vmul.f32 %v782, %v1476
        %v1478 = vpack.c.bf16 %v1445, %v1443
        %v1479 = vpack.c.bf16 %v1477, %v1475
        %1481 = vrot.lane.b32.xlu0 %v1478, 32
        %v1482 = vpop.permute.xlu0 %1481
        %1484 = vrot.lane.b32.xlu0 %v1479, 32
        %v1485 = vpop.permute.xlu0 %1484
        %v1487 = vsel %vm847, %v1482, 0
        %v1490 = vsel %vm847, %v1485, 0
        %1492 = vmatprep.subr.bf16.mxu0 0
        %1493 = vmatpush1.bf16.xpose.msra.mxu0 %v1490
        %1494 = vmatprep.subr.bf16.mxu0 0
        %1495 = vmatpush1.bf16.xpose.msra.mxu0 0
        %1496 = vmatprep.subr.bf16.mxu0 0
        %1497 = vmatpush1.bf16.xpose.msra.mxu0 0
        %1498 = vmatprep.subr.bf16.mxu0 0
        %1499 = vmatpush1.bf16.xpose.msra.mxu0 0
        %1500 = vmatprep.subr.bf16.mxu0 0
        %1501 = vmatpush1.bf16.xpose.msra.mxu0 0
        %1502 = vmatprep.subr.bf16.mxu0 0
        %1503 = vmatpush1.bf16.xpose.msra.mxu0 0
        %1504 = vmatprep.subr.bf16.mxu0 0
        %1505 = vmatpush1.bf16.xpose.msra.mxu0 0
        %1506 = vmatprep.subr.bf16.mxu0 0
        %1507 = vmatpush1.bf16.xpose.msra.mxu0 0
        %1508 = vmatprep.subr.bf16.mxu0 0
        %1509 = vmatpush1.bf16.xpose.msra.mxu0 0
        %1510 = vmatprep.subr.bf16.mxu0 0
        %1511 = vmatpush1.bf16.xpose.msra.mxu0 0
        %1512 = vmatprep.subr.bf16.mxu0 0
        %1513 = vmatpush1.bf16.xpose.msra.mxu0 0
        %1514 = vmatprep.subr.bf16.mxu0 0
        %1515 = vmatpush1.bf16.xpose.msra.mxu0 0
        %1516 = vmatprep.subr.bf16.mxu0 0
        %1517 = vmatpush1.bf16.xpose.msra.mxu0 0
        %1518 = vmatprep.subr.bf16.mxu0 0
        %1519 = vmatpush1.bf16.xpose.msra.mxu0 0
        %1520 = vmatprep.subr.bf16.mxu0 0
        %1521 = vmatpush1.bf16.xpose.msra.mxu0 0
        %1522 = vmatprep.subr.bf16.mxu0 0
        %1523 = vmatpush1.bf16.xpose.msra.mxu0 0
        %1524 = vmatprep.mubr.bf16.mxu0 0
        %1525 = vmatmul.mubr.bf16.gmra.mrb[0].mxu0 %v1487
        %v1526 = vpop.f32.mrb[0].mxu0
        %v1527 = vadd.f32 0.0, %v1526
        %v1528 = vpop.f32.mrb[0].mxu0
        %v1529 = vpop.f32.mrb[0].mxu0
        %v1530 = vadd.f32 0.0, %v1529
        %v1531 = vpop.f32.mrb[0].mxu0
        %1532 = vdwg.mxu0
        %v1533 = vmul.f32 %v1527, 11.313708
        %v1534 = vmul.f32 %v1530, 11.313708
        %v1535 = vsel %vm843, %v1533, -1e+30
        %v1536 = vsel %vm844, %v1534, -1e+30
        %v1537 = vsel %vm955, %v1535, -inf
        %1538 = vmax.xlane.f32.xlu0 %v1537
        %v1539 = vpop.xlane.xlu0 %1538
        %v1540 = vsel %vm955, %v1536, -inf
        %1541 = vmax.xlane.f32.xlu0 %v1540
        %v1542 = vpop.xlane.xlu0 %1541
        %v1543 = vsub.f32 %v1535, %v1539
        %v1544 = vsub.f32 %v1536, %v1542
        %v1545 = vmul.f32 %v1543, 1.442695
        %v1546 = vpow.pop %v1545
        %v1547 = vmul.f32 %v1544, 1.442695
        %v1548 = vpow.pop %v1547
        %v1549 = vsel %vm955, %v1546, 0.0
        %1550 = vadd.xlane.f32.xlu0 %v1549
        %v1551 = vpop.xlane.xlu0 %1550
        %v1552 = vsel %vm955, %v1548, 0.0
        %1553 = vadd.xlane.f32.xlu0 %v1552
        %v1554 = vpop.xlane.xlu0 %1553
        %v1555 = vrcp.pop %v1551
        %v1556 = vrcp.pop %v1554
        %v1557 = vmul.f32 %v1546, %v1555
        %v1558 = vmul.f32 %v1548, %v1556
        %v1559 = vpack.c.bf16 %v1558, %v1557
        %1560 = vrot.lane.b32.xlu0 %v837, 32
        %v1561 = vpop.permute.xlu0 %1560
        %v1564 = vsel %vm955, %v1559, 0
        %1566 = vmatprep.subr.bf16.mxu0 0
        %1567 = vmatpush1.bf16.msra.mxu0 %v1561
        %1568 = vmatprep.subr.bf16.mxu0 0
        %1569 = vmatpush1.bf16.msra.mxu0 0
        %1570 = vmatprep.subr.bf16.mxu0 0
        %1571 = vmatpush1.bf16.msra.mxu0 0
        %1572 = vmatprep.subr.bf16.mxu0 0
        %1573 = vmatpush1.bf16.msra.mxu0 0
        %1574 = vmatprep.subr.bf16.mxu0 0
        %1575 = vmatpush1.bf16.msra.mxu0 0
        %1576 = vmatprep.subr.bf16.mxu0 0
        %1577 = vmatpush1.bf16.msra.mxu0 0
        %1578 = vmatprep.subr.bf16.mxu0 0
        %1579 = vmatpush1.bf16.msra.mxu0 0
        %1580 = vmatprep.subr.bf16.mxu0 0
        %1581 = vmatpush1.bf16.msra.mxu0 0
        %1582 = vmatprep.subr.bf16.mxu0 0
        %1583 = vmatpush1.bf16.msra.mxu0 0
        %1584 = vmatprep.subr.bf16.mxu0 0
        %1585 = vmatpush1.bf16.msra.mxu0 0
        %1586 = vmatprep.subr.bf16.mxu0 0
        %1587 = vmatpush1.bf16.msra.mxu0 0
        %1588 = vmatprep.subr.bf16.mxu0 0
        %1589 = vmatpush1.bf16.msra.mxu0 0
        %1590 = vmatprep.subr.bf16.mxu0 0
        %1591 = vmatpush1.bf16.msra.mxu0 0
        %1592 = vmatprep.subr.bf16.mxu0 0
        %1593 = vmatpush1.bf16.msra.mxu0 0
        %1594 = vmatprep.subr.bf16.mxu0 0
        %1595 = vmatpush1.bf16.msra.mxu0 0
        %1596 = vmatprep.subr.bf16.mxu0 0
        %1597 = vmatpush1.bf16.msra.mxu0 0
        %1598 = vmatprep.mubr.bf16.mxu0 0
        %1599 = vmatmul.mubr.bf16.gmra.mrb[0].mxu0 %v1564
        %v1600 = vpop.f32.mrb[0].mxu0
        %v1601 = vadd.f32 0.0, %v1600
        %v1602 = vpop.f32.mrb[0].mxu0
        %v1603 = vpop.f32.mrb[0].mxu0
        %v1604 = vadd.f32 0.0, %v1603
        %v1605 = vpop.f32.mrb[0].mxu0
        %1606 = vdwg.mxu0
        %1609 = vrot.lane.b32.xlu0 %v1215, 32
        %v1610 = vpop.permute.xlu0 %1609
        %1611 = vrot.lane.b32.xlu0 %v1218, 32
        %v1612 = vpop.permute.xlu0 %1611
        %1617 = vrot.lane.b32.xlu0 %v1408, 64
        %v1618 = vpop.permute.xlu0 %1617
        %1619 = vrot.lane.b32.xlu0 %v1411, 64
        %v1620 = vpop.permute.xlu0 %1619
        %1625 = vrot.lane.b32.xlu0 %v1601, 96
        %v1626 = vpop.permute.xlu0 %1625
        %1627 = vrot.lane.b32.xlu0 %v1604, 96
        %v1628 = vpop.permute.xlu0 %1627
        %v1631 = vsel %vm847, %v1017, %v1610
        %v1632 = vsel %vm847, %v1020, %v1612
        %vm1633 = vcmask 523264
        %v1634 = vsel %vm1633, %v1631, %v1618
        %v1635 = vsel %vm1633, %v1632, %v1620
        %vm1636 = vcmask 785408
        %v1637 = vsel %vm1636, %v1634, %v1626
        %v1638 = vsel %vm1636, %v1635, %v1628
        %v1639 = vpack.c.bf16 %v1638, %v1637
        %v1640 = vld [vmem:[#allocation14] sm:$0xf]
        %v1641 = vld [vmem:[#allocation14 + $0x4] sm:$0xf]
        %v1642 = vld [vmem:[#allocation14 + $0x8] sm:$0xf]
        %v1643 = vld [vmem:[#allocation14 + $0xc] sm:$0xf]
        %v1644 = vld [vmem:[#allocation14 + $0x10] sm:$0xf]
        %v1645 = vld [vmem:[#allocation14 + $0x14] sm:$0xf]
        %v1646 = vld [vmem:[#allocation14 + $0x18] sm:$0xf]
        %v1647 = vld [vmem:[#allocation14 + $0x1c] sm:$0xf]
        %v1648 = vld [vmem:[#allocation14 + $0x20] sm:$0xf]
        %v1649 = vld [vmem:[#allocation14 + $0x24] sm:$0xf]
        %v1650 = vld [vmem:[#allocation14 + $0x28] sm:$0xf]
        %v1651 = vld [vmem:[#allocation14 + $0x2c] sm:$0xf]
        %v1652 = vld [vmem:[#allocation14 + $0x30] sm:$0xf]
        %v1653 = vld [vmem:[#allocation14 + $0x34] sm:$0xf]
        %v1654 = vld [vmem:[#allocation14 + $0x38] sm:$0xf]
        %v1655 = vld [vmem:[#allocation14 + $0x3c] sm:$0xf]
        %v1672 = vunpack.c.l.b16 %v1640
        %v1673 = vunpack.c.l.b16 %v1641
        %v1674 = vunpack.c.l.b16 %v1642
        %v1675 = vunpack.c.l.b16 %v1643
        %v1676 = vunpack.c.l.b16 %v1644
        %v1677 = vunpack.c.l.b16 %v1645
        %v1678 = vunpack.c.l.b16 %v1646
        %v1679 = vunpack.c.l.b16 %v1647
        %v1680 = vunpack.c.l.b16 %v1648
        %v1681 = vunpack.c.l.b16 %v1649
        %v1682 = vunpack.c.l.b16 %v1650
        %v1683 = vunpack.c.l.b16 %v1651
        %v1684 = vunpack.c.l.b16 %v1652
        %v1685 = vunpack.c.l.b16 %v1653
        %v1686 = vunpack.c.l.b16 %v1654
        %v1687 = vunpack.c.l.b16 %v1655
        %v1688 = vpack.c.b16 %v1673, %v1672
        %v1689 = vpack.c.b16 %v1675, %v1674
        %v1690 = vpack.c.b16 %v1677, %v1676
        %v1691 = vpack.c.b16 %v1679, %v1678
        %v1692 = vpack.c.b16 %v1681, %v1680
        %v1693 = vpack.c.b16 %v1683, %v1682
        %v1694 = vpack.c.b16 %v1685, %v1684
        %v1695 = vpack.c.b16 %v1687, %v1686
        %1704 = vmatprep.subr.bf16.mxu0 0
        %1705 = vmatpush1.bf16.msra.mxu0 %v1688
        %1706 = vmatprep.subr.bf16.mxu0 0
        %1707 = vmatpush1.bf16.msra.mxu0 %v1689
        %1708 = vmatprep.subr.bf16.mxu0 0
        %1709 = vmatpush1.bf16.msra.mxu0 %v1690
        %1710 = vmatprep.subr.bf16.mxu0 0
        %1711 = vmatpush1.bf16.msra.mxu0 %v1691
        %1712 = vmatprep.subr.bf16.mxu0 0
        %1713 = vmatpush1.bf16.msra.mxu0 %v1692
        %1714 = vmatprep.subr.bf16.mxu0 0
        %1715 = vmatpush1.bf16.msra.mxu0 %v1693
        %1716 = vmatprep.subr.bf16.mxu0 0
        %1717 = vmatpush1.bf16.msra.mxu0 %v1694
        %1718 = vmatprep.subr.bf16.mxu0 0
        %1719 = vmatpush1.bf16.msra.mxu0 %v1695
        %1720 = vmatprep.subr.bf16.mxu0 0
        %1721 = vmatpush1.bf16.msra.mxu0 0
        %1722 = vmatprep.subr.bf16.mxu0 0
        %1723 = vmatpush1.bf16.msra.mxu0 0
        %1724 = vmatprep.subr.bf16.mxu0 0
        %1725 = vmatpush1.bf16.msra.mxu0 0
        %1726 = vmatprep.subr.bf16.mxu0 0
        %1727 = vmatpush1.bf16.msra.mxu0 0
        %1728 = vmatprep.subr.bf16.mxu0 0
        %1729 = vmatpush1.bf16.msra.mxu0 0
        %1730 = vmatprep.subr.bf16.mxu0 0
        %1731 = vmatpush1.bf16.msra.mxu0 0
        %1732 = vmatprep.subr.bf16.mxu0 0
        %1733 = vmatpush1.bf16.msra.mxu0 0
        %1734 = vmatprep.subr.bf16.mxu0 0
        %1735 = vmatpush1.bf16.msra.mxu0 0
        %1736 = vmatprep.mubr.bf16.mxu0 0
        %1737 = vmatmul.mubr.bf16.gmra.mrb[0].mxu0 %v1639
        %v1738 = vpop.f32.mrb[0].mxu0
        %v1739 = vadd.f32 0.0, %v1738
        %v1740 = vpop.f32.mrb[0].mxu0
        %v1741 = vpop.f32.mrb[0].mxu0
        %v1742 = vadd.f32 0.0, %v1741
        %v1743 = vpop.f32.mrb[0].mxu0
        %1744 = vdwg.mxu0
        %v1745 = vmul.f32 %v1739, %v1739
        %v1746 = vmul.f32 %v1742, %v1742
        %1747 = vadd.xlane.f32.xlu0 %v1745
        %v1748 = vpop.xlane.xlu0 %1747
        %1749 = vadd.xlane.f32.xlu0 %v1746
        %v1750 = vpop.xlane.xlu0 %1749
        %v1751 = vrsqrt.pop %v1748
        %v1752 = vmul.f32 %v1748, %v1751
        %vm1753 = vcmp.eq.f32.partialorder %v1748, inf
        %v1754 = vsel %vm1753, %v1748, %v1752
        %vm1755 = vcmp.eq.f32.partialorder %v1748, 0.0
        %v1756 = vand.u32 %v1748, 2147483648
        %v1757 = vsel %vm1755, %v1756, %v1754
        %v1758 = vrsqrt.pop %v1750
        %v1759 = vmul.f32 %v1750, %v1758
        %vm1760 = vcmp.eq.f32.partialorder %v1750, inf
        %v1761 = vsel %vm1760, %v1750, %v1759
        %vm1762 = vcmp.eq.f32.partialorder %v1750, 0.0
        %v1763 = vand.u32 %v1750, 2147483648
        %v1764 = vsel %vm1762, %v1763, %v1761
        %v1765 = vadd.f32 %v1757, 1.1920929e-07
        %v1766 = vadd.f32 %v1764, 1.1920929e-07
        %v1767 = vrcp.pop %v1765
        %v1768 = vmul.f32 %v1739, %v1767
        %v1769 = vrcp.pop %v1766
        %v1770 = vmul.f32 %v1742, %v1769
        %v1771 = vld [vmem:[%s9] sm:$0x1]
        %v1772 = vmul.f32 %v1771, 0.56568545
        %v1773 = vand.u32 2147483647, %v1772
        %v1774 = vsub.f32 %v1768, %v578
        %v1775 = vsub.f32 %v1770, %v579
        %v1777 = vlaneseq
        %v1778 = vshrl.u32 %v1777, 7
        %v1779 = vsub.s32 0, %v1778
        %v1780 = vrot.slane %v1773, %v1779
        %v1782 = vmul.f32 %v1780, %v1774
        %v1783 = vmul.f32 %v1780, %v1775
        %v1784 = vadd.f32 %v578, %v1782
        %v1785 = vadd.f32 %v579, %v1783
        %v1786 = vmul.f32 %v1784, %v1784
        %v1787 = vmul.f32 %v1785, %v1785
        %1788 = vadd.xlane.f32.xlu0 %v1786
        %v1789 = vpop.xlane.xlu0 %1788
        %1790 = vadd.xlane.f32.xlu0 %v1787
        %v1791 = vpop.xlane.xlu0 %1790
        %v1792 = vrsqrt.pop %v1789
        %v1793 = vmul.f32 %v1789, %v1792
        %vm1794 = vcmp.eq.f32.partialorder %v1789, inf
        %v1795 = vsel %vm1794, %v1789, %v1793
        %vm1796 = vcmp.eq.f32.partialorder %v1789, 0.0
        %v1797 = vand.u32 %v1789, 2147483648
        %v1798 = vsel %vm1796, %v1797, %v1795
        %v1799 = vrsqrt.pop %v1791
        %v1800 = vmul.f32 %v1791, %v1799
        %vm1801 = vcmp.eq.f32.partialorder %v1791, inf
        %v1802 = vsel %vm1801, %v1791, %v1800
        %vm1803 = vcmp.eq.f32.partialorder %v1791, 0.0
        %v1804 = vand.u32 %v1791, 2147483648
        %v1805 = vsel %vm1803, %v1804, %v1802
        %v1806 = vadd.f32 %v1798, 1.1920929e-07
        %v1807 = vadd.f32 %v1805, 1.1920929e-07
        %v1808 = vrcp.pop %v1806
        %v1809 = vmul.f32 %v1784, %v1808
        %v1810 = vrcp.pop %v1807
        %v1811 = vmul.f32 %v1785, %v1810
        %v1812 = vpack.c.bf16 %v1811, %v1809
        %v1813 = vld [vmem:[#allocation15] sm:$0xff]
        %v1814 = vld [vmem:[#allocation15 + $0x8] sm:$0xff]
        %v1815 = vld [vmem:[#allocation15 + $0x10] sm:$0xff]
        %v1816 = vld [vmem:[#allocation15 + $0x18] sm:$0xff]
        %v1817 = vld [vmem:[#allocation15 + $0x20] sm:$0xff]
        %v1818 = vld [vmem:[#allocation15 + $0x28] sm:$0xff]
        %v1819 = vld [vmem:[#allocation15 + $0x30] sm:$0xff]
        %v1820 = vld [vmem:[#allocation15 + $0x38] sm:$0xff]
        %v1821 = vld [vmem:[#allocation15 + $0x40] sm:$0xff]
        %v1822 = vld [vmem:[#allocation15 + $0x48] sm:$0xff]
        %v1823 = vld [vmem:[#allocation15 + $0x50] sm:$0xff]
        %v1824 = vld [vmem:[#allocation15 + $0x58] sm:$0xff]
        %v1825 = vld [vmem:[#allocation15 + $0x60] sm:$0xff]
        %v1826 = vld [vmem:[#allocation15 + $0x68] sm:$0xff]
        %v1827 = vld [vmem:[#allocation15 + $0x70] sm:$0xff]
        %v1828 = vld [vmem:[#allocation15 + $0x78] sm:$0xff]
        %v1829 = vld [vmem:[#allocation15 + $0x80] sm:$0xff]
        %v1830 = vld [vmem:[#allocation15 + $0x88] sm:$0xff]
        %v1831 = vld [vmem:[#allocation15 + $0x90] sm:$0xff]
        %v1832 = vld [vmem:[#allocation15 + $0x98] sm:$0xff]
        %v1833 = vld [vmem:[#allocation15 + $0xa0] sm:$0xff]
        %v1834 = vld [vmem:[#allocation15 + $0xa8] sm:$0xff]
        %v1835 = vld [vmem:[#allocation15 + $0xb0] sm:$0xff]
        %v1836 = vld [vmem:[#allocation15 + $0xb8] sm:$0xff]
        %v1837 = vld [vmem:[#allocation15 + $0xc0] sm:$0xff]
        %v1838 = vld [vmem:[#allocation15 + $0xc8] sm:$0xff]
        %v1839 = vld [vmem:[#allocation15 + $0xd0] sm:$0xff]
        %v1840 = vld [vmem:[#allocation15 + $0xd8] sm:$0xff]
        %v1841 = vld [vmem:[#allocation15 + $0xe0] sm:$0xff]
        %v1842 = vld [vmem:[#allocation15 + $0xe8] sm:$0xff]
        %v1843 = vld [vmem:[#allocation15 + $0xf0] sm:$0xff]
        %v1844 = vld [vmem:[#allocation15 + $0xf8] sm:$0xff]
        %v1877 = vunpack.c.l.b16 %v1813
        %v1878 = vunpack.c.h.b16 %v1813
        %v1879 = vunpack.c.l.b16 %v1814
        %v1880 = vunpack.c.h.b16 %v1814
        %v1881 = vunpack.c.l.b16 %v1815
        %v1882 = vunpack.c.h.b16 %v1815
        %v1883 = vunpack.c.l.b16 %v1816
        %v1884 = vunpack.c.h.b16 %v1816
        %v1885 = vunpack.c.l.b16 %v1817
        %v1886 = vunpack.c.h.b16 %v1817
        %v1887 = vunpack.c.l.b16 %v1818
        %v1888 = vunpack.c.h.b16 %v1818
        %v1889 = vunpack.c.l.b16 %v1819
        %v1890 = vunpack.c.h.b16 %v1819
        %v1891 = vunpack.c.l.b16 %v1820
        %v1892 = vunpack.c.h.b16 %v1820
        %v1893 = vunpack.c.l.b16 %v1821
        %v1894 = vunpack.c.h.b16 %v1821
        %v1895 = vunpack.c.l.b16 %v1822
        %v1896 = vunpack.c.h.b16 %v1822
        %v1897 = vunpack.c.l.b16 %v1823
        %v1898 = vunpack.c.h.b16 %v1823
        %v1899 = vunpack.c.l.b16 %v1824
        %v1900 = vunpack.c.h.b16 %v1824
        %v1901 = vunpack.c.l.b16 %v1825
        %v1902 = vunpack.c.h.b16 %v1825
        %v1903 = vunpack.c.l.b16 %v1826
        %v1904 = vunpack.c.h.b16 %v1826
        %v1905 = vunpack.c.l.b16 %v1827
        %v1906 = vunpack.c.h.b16 %v1827
        %v1907 = vunpack.c.l.b16 %v1828
        %v1908 = vunpack.c.h.b16 %v1828
        %v1909 = vunpack.c.l.b16 %v1829
        %v1910 = vunpack.c.h.b16 %v1829
        %v1911 = vunpack.c.l.b16 %v1830
        %v1912 = vunpack.c.h.b16 %v1830
        %v1913 = vunpack.c.l.b16 %v1831
        %v1914 = vunpack.c.h.b16 %v1831
        %v1915 = vunpack.c.l.b16 %v1832
        %v1916 = vunpack.c.h.b16 %v1832
        %v1917 = vunpack.c.l.b16 %v1833
        %v1918 = vunpack.c.h.b16 %v1833
        %v1919 = vunpack.c.l.b16 %v1834
        %v1920 = vunpack.c.h.b16 %v1834
        %v1921 = vunpack.c.l.b16 %v1835
        %v1922 = vunpack.c.h.b16 %v1835
        %v1923 = vunpack.c.l.b16 %v1836
        %v1924 = vunpack.c.h.b16 %v1836
        %v1925 = vunpack.c.l.b16 %v1837
        %v1926 = vunpack.c.h.b16 %v1837
        %v1927 = vunpack.c.l.b16 %v1838
        %v1928 = vunpack.c.h.b16 %v1838
        %v1929 = vunpack.c.l.b16 %v1839
        %v1930 = vunpack.c.h.b16 %v1839
        %v1931 = vunpack.c.l.b16 %v1840
        %v1932 = vunpack.c.h.b16 %v1840
        %v1933 = vunpack.c.l.b16 %v1841
        %v1934 = vunpack.c.h.b16 %v1841
        %v1935 = vunpack.c.l.b16 %v1842
        %v1936 = vunpack.c.h.b16 %v1842
        %v1937 = vunpack.c.l.b16 %v1843
        %v1938 = vunpack.c.h.b16 %v1843
        %v1939 = vunpack.c.l.b16 %v1844
        %v1940 = vunpack.c.h.b16 %v1844
        %v1941 = vpack.c.b16 %v1881, %v1877
        %v1942 = vpack.c.b16 %v1882, %v1878
        %v1943 = vpack.c.b16 %v1883, %v1879
        %v1944 = vpack.c.b16 %v1884, %v1880
        %v1945 = vpack.c.b16 %v1889, %v1885
        %v1946 = vpack.c.b16 %v1890, %v1886
        %v1947 = vpack.c.b16 %v1891, %v1887
        %v1948 = vpack.c.b16 %v1892, %v1888
        %v1949 = vpack.c.b16 %v1897, %v1893
        %v1950 = vpack.c.b16 %v1898, %v1894
        %v1951 = vpack.c.b16 %v1899, %v1895
        %v1952 = vpack.c.b16 %v1900, %v1896
        %v1953 = vpack.c.b16 %v1905, %v1901
        %v1954 = vpack.c.b16 %v1906, %v1902
        %v1955 = vpack.c.b16 %v1907, %v1903
        %v1956 = vpack.c.b16 %v1908, %v1904
        %v1957 = vpack.c.b16 %v1913, %v1909
        %v1958 = vpack.c.b16 %v1914, %v1910
        %v1959 = vpack.c.b16 %v1915, %v1911
        %v1960 = vpack.c.b16 %v1916, %v1912
        %v1961 = vpack.c.b16 %v1921, %v1917
        %v1962 = vpack.c.b16 %v1922, %v1918
        %v1963 = vpack.c.b16 %v1923, %v1919
        %v1964 = vpack.c.b16 %v1924, %v1920
        %v1965 = vpack.c.b16 %v1929, %v1925
        %v1966 = vpack.c.b16 %v1930, %v1926
        %v1967 = vpack.c.b16 %v1931, %v1927
        %v1968 = vpack.c.b16 %v1932, %v1928
        %v1969 = vpack.c.b16 %v1937, %v1933
        %v1970 = vpack.c.b16 %v1938, %v1934
        %v1971 = vpack.c.b16 %v1939, %v1935
        %v1972 = vpack.c.b16 %v1940, %v1936
        %2005 = vmatprep.subr.bf16.mxu0 %v1942
        %2006 = vmatpush1.bf16.msra.mxu0 %v1941
        %2007 = vmatprep.subr.bf16.mxu0 %v1946
        %2008 = vmatpush1.bf16.msra.mxu0 %v1945
        %2009 = vmatprep.subr.bf16.mxu0 %v1950
        %2010 = vmatpush1.bf16.msra.mxu0 %v1949
        %2011 = vmatprep.subr.bf16.mxu0 %v1954
        %2012 = vmatpush1.bf16.msra.mxu0 %v1953
        %2013 = vmatprep.subr.bf16.mxu0 %v1958
        %2014 = vmatpush1.bf16.msra.mxu0 %v1957
        %2015 = vmatprep.subr.bf16.mxu0 %v1962
        %2016 = vmatpush1.bf16.msra.mxu0 %v1961
        %2017 = vmatprep.subr.bf16.mxu0 %v1966
        %2018 = vmatpush1.bf16.msra.mxu0 %v1965
        %2019 = vmatprep.subr.bf16.mxu0 %v1970
        %2020 = vmatpush1.bf16.msra.mxu0 %v1969
        %2021 = vmatprep.subr.bf16.mxu0 0
        %2022 = vmatpush1.bf16.msra.mxu0 0
        %2023 = vmatprep.subr.bf16.mxu0 0
        %2024 = vmatpush1.bf16.msra.mxu0 0
        %2025 = vmatprep.subr.bf16.mxu0 0
        %2026 = vmatpush1.bf16.msra.mxu0 0
        %2027 = vmatprep.subr.bf16.mxu0 0
        %2028 = vmatpush1.bf16.msra.mxu0 0
        %2029 = vmatprep.subr.bf16.mxu0 0
        %2030 = vmatpush1.bf16.msra.mxu0 0
        %2031 = vmatprep.subr.bf16.mxu0 0
        %2032 = vmatpush1.bf16.msra.mxu0 0
        %2033 = vmatprep.subr.bf16.mxu0 0
        %2034 = vmatpush1.bf16.msra.mxu0 0
        %2035 = vmatprep.subr.bf16.mxu0 0
        %2036 = vmatpush1.bf16.msra.mxu0 0
        %2037 = vmatprep.mubr.bf16.mxu0 0
        %2038 = vmatmul.mubr.bf16.gmra.mrb[0].mxu0 %v1812
        %v2039 = vpop.f32.mrb[0].mxu0
        %v2040 = vadd.f32 0.0, %v2039
        %v2041 = vpop.f32.mrb[0].mxu0
        %v2042 = vadd.f32 0.0, %v2041
        %v2043 = vpop.f32.mrb[0].mxu0
        %v2044 = vadd.f32 0.0, %v2043
        %v2045 = vpop.f32.mrb[0].mxu0
        %v2046 = vadd.f32 0.0, %v2045
        %2047 = vdwg.mxu0
        %2048 = vmatprep.subr.bf16.mxu0 %v1944
        %2049 = vmatpush1.bf16.msra.mxu0 %v1943
        %2050 = vmatprep.subr.bf16.mxu0 %v1948
        %2051 = vmatpush1.bf16.msra.mxu0 %v1947
        %2052 = vmatprep.subr.bf16.mxu0 %v1952
        %2053 = vmatpush1.bf16.msra.mxu0 %v1951
        %2054 = vmatprep.subr.bf16.mxu0 %v1956
        %2055 = vmatpush1.bf16.msra.mxu0 %v1955
        %2056 = vmatprep.subr.bf16.mxu0 %v1960
        %2057 = vmatpush1.bf16.msra.mxu0 %v1959
        %2058 = vmatprep.subr.bf16.mxu0 %v1964
        %2059 = vmatpush1.bf16.msra.mxu0 %v1963
        %2060 = vmatprep.subr.bf16.mxu0 %v1968
        %2061 = vmatpush1.bf16.msra.mxu0 %v1967
        %2062 = vmatprep.subr.bf16.mxu0 %v1972
        %2063 = vmatpush1.bf16.msra.mxu0 %v1971
        %2064 = vmatprep.subr.bf16.mxu0 0
        %2065 = vmatpush1.bf16.msra.mxu0 0
        %2066 = vmatprep.subr.bf16.mxu0 0
        %2067 = vmatpush1.bf16.msra.mxu0 0
        %2068 = vmatprep.subr.bf16.mxu0 0
        %2069 = vmatpush1.bf16.msra.mxu0 0
        %2070 = vmatprep.subr.bf16.mxu0 0
        %2071 = vmatpush1.bf16.msra.mxu0 0
        %2072 = vmatprep.subr.bf16.mxu0 0
        %2073 = vmatpush1.bf16.msra.mxu0 0
        %2074 = vmatprep.subr.bf16.mxu0 0
        %2075 = vmatpush1.bf16.msra.mxu0 0
        %2076 = vmatprep.subr.bf16.mxu0 0
        %2077 = vmatpush1.bf16.msra.mxu0 0
        %2078 = vmatprep.subr.bf16.mxu0 0
        %2079 = vmatpush1.bf16.msra.mxu0 0
        %2080 = vmatprep.mubr.bf16.mxu0 0
        %2081 = vmatmul.mubr.bf16.gmra.mrb[0].mxu0 %v1812
        %v2082 = vpop.f32.mrb[0].mxu0
        %v2083 = vadd.f32 0.0, %v2082
        %v2084 = vpop.f32.mrb[0].mxu0
        %v2085 = vadd.f32 0.0, %v2084
        %v2086 = vpop.f32.mrb[0].mxu0
        %v2087 = vadd.f32 0.0, %v2086
        %v2088 = vpop.f32.mrb[0].mxu0
        %v2089 = vadd.f32 0.0, %v2088
        %2090 = vdwg.mxu0
        %v2091 = vmax.f32 %v2040, 0.0
        %v2092 = vmax.f32 %v2042, 0.0
        %v2093 = vmax.f32 %v2083, 0.0
        %v2094 = vmax.f32 %v2085, 0.0
        %v2095 = vmax.f32 %v2044, 0.0
        %v2096 = vmax.f32 %v2046, 0.0
        %v2097 = vmax.f32 %v2087, 0.0
        %v2098 = vmax.f32 %v2089, 0.0
        %v2099 = vmul.f32 %v2091, %v2091
        %v2100 = vmul.f32 %v2092, %v2092
        %v2101 = vmul.f32 %v2093, %v2093
        %v2102 = vmul.f32 %v2094, %v2094
        %v2103 = vmul.f32 %v2095, %v2095
        %v2104 = vmul.f32 %v2096, %v2096
        %v2105 = vmul.f32 %v2097, %v2097
        %v2106 = vmul.f32 %v2098, %v2098
        %v2107 = vpack.c.bf16 %v2103, %v2099
        %v2108 = vpack.c.bf16 %v2104, %v2100
        %v2109 = vpack.c.bf16 %v2105, %v2101
        %v2110 = vpack.c.bf16 %v2106, %v2102
        %v2111 = vld [vmem:[#allocation17] sm:$0xf]
        %v2112 = vld [vmem:[#allocation17 + $0x4] sm:$0xf]
        %v2113 = vld [vmem:[#allocation17 + $0x8] sm:$0xf]
        %v2114 = vld [vmem:[#allocation17 + $0xc] sm:$0xf]
        %v2115 = vld [vmem:[#allocation17 + $0x10] sm:$0xf]
        %v2116 = vld [vmem:[#allocation17 + $0x14] sm:$0xf]
        %v2117 = vld [vmem:[#allocation17 + $0x18] sm:$0xf]
        %v2118 = vld [vmem:[#allocation17 + $0x1c] sm:$0xf]
        %v2119 = vld [vmem:[#allocation17 + $0x20] sm:$0xf]
        %v2120 = vld [vmem:[#allocation17 + $0x24] sm:$0xf]
        %v2121 = vld [vmem:[#allocation17 + $0x28] sm:$0xf]
        %v2122 = vld [vmem:[#allocation17 + $0x2c] sm:$0xf]
        %v2123 = vld [vmem:[#allocation17 + $0x30] sm:$0xf]
        %v2124 = vld [vmem:[#allocation17 + $0x34] sm:$0xf]
        %v2125 = vld [vmem:[#allocation17 + $0x38] sm:$0xf]
        %v2126 = vld [vmem:[#allocation17 + $0x3c] sm:$0xf]
        %v2127 = vld [vmem:[#allocation17 + $0x40] sm:$0xf]
        %v2128 = vld [vmem:[#allocation17 + $0x44] sm:$0xf]
        %v2129 = vld [vmem:[#allocation17 + $0x48] sm:$0xf]
        %v2130 = vld [vmem:[#allocation17 + $0x4c] sm:$0xf]
        %v2131 = vld [vmem:[#allocation17 + $0x50] sm:$0xf]
        %v2132 = vld [vmem:[#allocation17 + $0x54] sm:$0xf]
        %v2133 = vld [vmem:[#allocation17 + $0x58] sm:$0xf]
        %v2134 = vld [vmem:[#allocation17 + $0x5c] sm:$0xf]
        %v2135 = vld [vmem:[#allocation17 + $0x60] sm:$0xf]
        %v2136 = vld [vmem:[#allocation17 + $0x64] sm:$0xf]
        %v2137 = vld [vmem:[#allocation17 + $0x68] sm:$0xf]
        %v2138 = vld [vmem:[#allocation17 + $0x6c] sm:$0xf]
        %v2139 = vld [vmem:[#allocation17 + $0x70] sm:$0xf]
        %v2140 = vld [vmem:[#allocation17 + $0x74] sm:$0xf]
        %v2141 = vld [vmem:[#allocation17 + $0x78] sm:$0xf]
        %v2142 = vld [vmem:[#allocation17 + $0x7c] sm:$0xf]
        %v2143 = vld [vmem:[#allocation17 + $0x80] sm:$0xf]
        %v2144 = vld [vmem:[#allocation17 + $0x84] sm:$0xf]
        %v2145 = vld [vmem:[#allocation17 + $0x88] sm:$0xf]
        %v2146 = vld [vmem:[#allocation17 + $0x8c] sm:$0xf]
        %v2147 = vld [vmem:[#allocation17 + $0x90] sm:$0xf]
        %v2148 = vld [vmem:[#allocation17 + $0x94] sm:$0xf]
        %v2149 = vld [vmem:[#allocation17 + $0x98] sm:$0xf]
        %v2150 = vld [vmem:[#allocation17 + $0x9c] sm:$0xf]
        %v2151 = vld [vmem:[#allocation17 + $0xa0] sm:$0xf]
        %v2152 = vld [vmem:[#allocation17 + $0xa4] sm:$0xf]
        %v2153 = vld [vmem:[#allocation17 + $0xa8] sm:$0xf]
        %v2154 = vld [vmem:[#allocation17 + $0xac] sm:$0xf]
        %v2155 = vld [vmem:[#allocation17 + $0xb0] sm:$0xf]
        %v2156 = vld [vmem:[#allocation17 + $0xb4] sm:$0xf]
        %v2157 = vld [vmem:[#allocation17 + $0xb8] sm:$0xf]
        %v2158 = vld [vmem:[#allocation17 + $0xbc] sm:$0xf]
        %v2159 = vld [vmem:[#allocation17 + $0xc0] sm:$0xf]
        %v2160 = vld [vmem:[#allocation17 + $0xc4] sm:$0xf]
        %v2161 = vld [vmem:[#allocation17 + $0xc8] sm:$0xf]
        %v2162 = vld [vmem:[#allocation17 + $0xcc] sm:$0xf]
        %v2163 = vld [vmem:[#allocation17 + $0xd0] sm:$0xf]
        %v2164 = vld [vmem:[#allocation17 + $0xd4] sm:$0xf]
        %v2165 = vld [vmem:[#allocation17 + $0xd8] sm:$0xf]
        %v2166 = vld [vmem:[#allocation17 + $0xdc] sm:$0xf]
        %v2167 = vld [vmem:[#allocation17 + $0xe0] sm:$0xf]
        %v2168 = vld [vmem:[#allocation17 + $0xe4] sm:$0xf]
        %v2169 = vld [vmem:[#allocation17 + $0xe8] sm:$0xf]
        %v2170 = vld [vmem:[#allocation17 + $0xec] sm:$0xf]
        %v2171 = vld [vmem:[#allocation17 + $0xf0] sm:$0xf]
        %v2172 = vld [vmem:[#allocation17 + $0xf4] sm:$0xf]
        %v2173 = vld [vmem:[#allocation17 + $0xf8] sm:$0xf]
        %v2174 = vld [vmem:[#allocation17 + $0xfc] sm:$0xf]
        %v2239 = vunpack.c.l.b16 %v2111
        %v2240 = vunpack.c.l.b16 %v2112
        %v2241 = vunpack.c.l.b16 %v2113
        %v2242 = vunpack.c.l.b16 %v2114
        %v2243 = vunpack.c.l.b16 %v2115
        %v2244 = vunpack.c.l.b16 %v2116
        %v2245 = vunpack.c.l.b16 %v2117
        %v2246 = vunpack.c.l.b16 %v2118
        %v2247 = vunpack.c.l.b16 %v2119
        %v2248 = vunpack.c.l.b16 %v2120
        %v2249 = vunpack.c.l.b16 %v2121
        %v2250 = vunpack.c.l.b16 %v2122
        %v2251 = vunpack.c.l.b16 %v2123
        %v2252 = vunpack.c.l.b16 %v2124
        %v2253 = vunpack.c.l.b16 %v2125
        %v2254 = vunpack.c.l.b16 %v2126
        %v2255 = vunpack.c.l.b16 %v2127
        %v2256 = vunpack.c.l.b16 %v2128
        %v2257 = vunpack.c.l.b16 %v2129
        %v2258 = vunpack.c.l.b16 %v2130
        %v2259 = vunpack.c.l.b16 %v2131
        %v2260 = vunpack.c.l.b16 %v2132
        %v2261 = vunpack.c.l.b16 %v2133
        %v2262 = vunpack.c.l.b16 %v2134
        %v2263 = vunpack.c.l.b16 %v2135
        %v2264 = vunpack.c.l.b16 %v2136
        %v2265 = vunpack.c.l.b16 %v2137
        %v2266 = vunpack.c.l.b16 %v2138
        %v2267 = vunpack.c.l.b16 %v2139
        %v2268 = vunpack.c.l.b16 %v2140
        %v2269 = vunpack.c.l.b16 %v2141
        %v2270 = vunpack.c.l.b16 %v2142
        %v2271 = vunpack.c.l.b16 %v2143
        %v2272 = vunpack.c.l.b16 %v2144
        %v2273 = vunpack.c.l.b16 %v2145
        %v2274 = vunpack.c.l.b16 %v2146
        %v2275 = vunpack.c.l.b16 %v2147
        %v2276 = vunpack.c.l.b16 %v2148
        %v2277 = vunpack.c.l.b16 %v2149
        %v2278 = vunpack.c.l.b16 %v2150
        %v2279 = vunpack.c.l.b16 %v2151
        %v2280 = vunpack.c.l.b16 %v2152
        %v2281 = vunpack.c.l.b16 %v2153
        %v2282 = vunpack.c.l.b16 %v2154
        %v2283 = vunpack.c.l.b16 %v2155
        %v2284 = vunpack.c.l.b16 %v2156
        %v2285 = vunpack.c.l.b16 %v2157
        %v2286 = vunpack.c.l.b16 %v2158
        %v2287 = vunpack.c.l.b16 %v2159
        %v2288 = vunpack.c.l.b16 %v2160
        %v2289 = vunpack.c.l.b16 %v2161
        %v2290 = vunpack.c.l.b16 %v2162
        %v2291 = vunpack.c.l.b16 %v2163
        %v2292 = vunpack.c.l.b16 %v2164
        %v2293 = vunpack.c.l.b16 %v2165
        %v2294 = vunpack.c.l.b16 %v2166
        %v2295 = vunpack.c.l.b16 %v2167
        %v2296 = vunpack.c.l.b16 %v2168
        %v2297 = vunpack.c.l.b16 %v2169
        %v2298 = vunpack.c.l.b16 %v2170
        %v2299 = vunpack.c.l.b16 %v2171
        %v2300 = vunpack.c.l.b16 %v2172
        %v2301 = vunpack.c.l.b16 %v2173
        %v2302 = vunpack.c.l.b16 %v2174
        %v2303 = vpack.c.b16 %v2240, %v2239
        %v2304 = vpack.c.b16 %v2242, %v2241
        %v2305 = vpack.c.b16 %v2244, %v2243
        %v2306 = vpack.c.b16 %v2246, %v2245
        %v2307 = vpack.c.b16 %v2248, %v2247
        %v2308 = vpack.c.b16 %v2250, %v2249
        %v2309 = vpack.c.b16 %v2252, %v2251
        %v2310 = vpack.c.b16 %v2254, %v2253
        %v2311 = vpack.c.b16 %v2256, %v2255
        %v2312 = vpack.c.b16 %v2258, %v2257
        %v2313 = vpack.c.b16 %v2260, %v2259
        %v2314 = vpack.c.b16 %v2262, %v2261
        %v2315 = vpack.c.b16 %v2264, %v2263
        %v2316 = vpack.c.b16 %v2266, %v2265
        %v2317 = vpack.c.b16 %v2268, %v2267
        %v2318 = vpack.c.b16 %v2270, %v2269
        %v2319 = vpack.c.b16 %v2272, %v2271
        %v2320 = vpack.c.b16 %v2274, %v2273
        %v2321 = vpack.c.b16 %v2276, %v2275
        %v2322 = vpack.c.b16 %v2278, %v2277
        %v2323 = vpack.c.b16 %v2280, %v2279
        %v2324 = vpack.c.b16 %v2282, %v2281
        %v2325 = vpack.c.b16 %v2284, %v2283
        %v2326 = vpack.c.b16 %v2286, %v2285
        %v2327 = vpack.c.b16 %v2288, %v2287
        %v2328 = vpack.c.b16 %v2290, %v2289
        %v2329 = vpack.c.b16 %v2292, %v2291
        %v2330 = vpack.c.b16 %v2294, %v2293
        %v2331 = vpack.c.b16 %v2296, %v2295
        %v2332 = vpack.c.b16 %v2298, %v2297
        %v2333 = vpack.c.b16 %v2300, %v2299
        %v2334 = vpack.c.b16 %v2302, %v2301
        %2367 = vmatprep.subr.bf16.mxu0 0
        %2368 = vmatpush1.bf16.msra.mxu0 %v2303
        %2369 = vmatprep.subr.bf16.mxu0 0
        %2370 = vmatpush1.bf16.msra.mxu0 %v2304
        %2371 = vmatprep.subr.bf16.mxu0 0
        %2372 = vmatpush1.bf16.msra.mxu0 %v2305
        %2373 = vmatprep.subr.bf16.mxu0 0
        %2374 = vmatpush1.bf16.msra.mxu0 %v2306
        %2375 = vmatprep.subr.bf16.mxu0 0
        %2376 = vmatpush1.bf16.msra.mxu0 %v2307
        %2377 = vmatprep.subr.bf16.mxu0 0
        %2378 = vmatpush1.bf16.msra.mxu0 %v2308
        %2379 = vmatprep.subr.bf16.mxu0 0
        %2380 = vmatpush1.bf16.msra.mxu0 %v2309
        %2381 = vmatprep.subr.bf16.mxu0 0
        %2382 = vmatpush1.bf16.msra.mxu0 %v2310
        %2383 = vmatprep.subr.bf16.mxu0 0
        %2384 = vmatpush1.bf16.msra.mxu0 %v2311
        %2385 = vmatprep.subr.bf16.mxu0 0
        %2386 = vmatpush1.bf16.msra.mxu0 %v2312
        %2387 = vmatprep.subr.bf16.mxu0 0
        %2388 = vmatpush1.bf16.msra.mxu0 %v2313
        %2389 = vmatprep.subr.bf16.mxu0 0
        %2390 = vmatpush1.bf16.msra.mxu0 %v2314
        %2391 = vmatprep.subr.bf16.mxu0 0
        %2392 = vmatpush1.bf16.msra.mxu0 %v2315
        %2393 = vmatprep.subr.bf16.mxu0 0
        %2394 = vmatpush1.bf16.msra.mxu0 %v2316
        %2395 = vmatprep.subr.bf16.mxu0 0
        %2396 = vmatpush1.bf16.msra.mxu0 %v2317
        %2397 = vmatprep.subr.bf16.mxu0 0
        %2398 = vmatpush1.bf16.msra.mxu0 %v2318
        %2399 = vmatprep.mubr.bf16.mxu0 %v2108
        %2400 = vmatmul.mubr.bf16.gmra.mrb[0].mxu0 %v2107
        %v2401 = vpop.f32.mrb[0].mxu0
        %v2402 = vadd.f32 0.0, %v2401
        %v2403 = vpop.f32.mrb[0].mxu0
        %v2404 = vpop.f32.mrb[0].mxu0
        %v2405 = vadd.f32 0.0, %v2404
        %v2406 = vpop.f32.mrb[0].mxu0
        %2407 = vdwg.mxu0
        %2408 = vmatprep.subr.bf16.mxu0 0
        %2409 = vmatpush1.bf16.msra.mxu0 %v2319
        %2410 = vmatprep.subr.bf16.mxu0 0
        %2411 = vmatpush1.bf16.msra.mxu0 %v2320
        %2412 = vmatprep.subr.bf16.mxu0 0
        %2413 = vmatpush1.bf16.msra.mxu0 %v2321
        %2414 = vmatprep.subr.bf16.mxu0 0
        %2415 = vmatpush1.bf16.msra.mxu0 %v2322
        %2416 = vmatprep.subr.bf16.mxu0 0
        %2417 = vmatpush1.bf16.msra.mxu0 %v2323
        %2418 = vmatprep.subr.bf16.mxu0 0
        %2419 = vmatpush1.bf16.msra.mxu0 %v2324
        %2420 = vmatprep.subr.bf16.mxu0 0
        %2421 = vmatpush1.bf16.msra.mxu0 %v2325
        %2422 = vmatprep.subr.bf16.mxu0 0
        %2423 = vmatpush1.bf16.msra.mxu0 %v2326
        %2424 = vmatprep.subr.bf16.mxu0 0
        %2425 = vmatpush1.bf16.msra.mxu0 %v2327
        %2426 = vmatprep.subr.bf16.mxu0 0
        %2427 = vmatpush1.bf16.msra.mxu0 %v2328
        %2428 = vmatprep.subr.bf16.mxu0 0
        %2429 = vmatpush1.bf16.msra.mxu0 %v2329
        %2430 = vmatprep.subr.bf16.mxu0 0
        %2431 = vmatpush1.bf16.msra.mxu0 %v2330
        %2432 = vmatprep.subr.bf16.mxu0 0
        %2433 = vmatpush1.bf16.msra.mxu0 %v2331
        %2434 = vmatprep.subr.bf16.mxu0 0
        %2435 = vmatpush1.bf16.msra.mxu0 %v2332
        %2436 = vmatprep.subr.bf16.mxu0 0
        %2437 = vmatpush1.bf16.msra.mxu0 %v2333
        %2438 = vmatprep.subr.bf16.mxu0 0
        %2439 = vmatpush1.bf16.msra.mxu0 %v2334
        %2440 = vmatprep.mubr.bf16.mxu0 %v2110
        %2441 = vmatmul.mubr.bf16.gmra.mrb[0].mxu0 %v2109
        %v2442 = vpop.f32.mrb[0].mxu0
        %v2443 = vadd.f32 %v2402, %v2442
        %v2444 = vpop.f32.mrb[0].mxu0
        %v2445 = vpop.f32.mrb[0].mxu0
        %v2446 = vadd.f32 %v2405, %v2445
        %v2447 = vpop.f32.mrb[0].mxu0
        %2448 = vdwg.mxu0
        %v2449 = vmul.f32 %v2443, %v2443
        %v2450 = vmul.f32 %v2446, %v2446
        %2451 = vadd.xlane.f32.xlu0 %v2449
        %v2452 = vpop.xlane.xlu0 %2451
        %2453 = vadd.xlane.f32.xlu0 %v2450
        %v2454 = vpop.xlane.xlu0 %2453
        %v2455 = vrsqrt.pop %v2452
        %v2456 = vmul.f32 %v2452, %v2455
        %vm2457 = vcmp.eq.f32.partialorder %v2452, inf
        %v2458 = vsel %vm2457, %v2452, %v2456
        %vm2459 = vcmp.eq.f32.partialorder %v2452, 0.0
        %v2460 = vand.u32 %v2452, 2147483648
        %v2461 = vsel %vm2459, %v2460, %v2458
        %v2462 = vrsqrt.pop %v2454
        %v2463 = vmul.f32 %v2454, %v2462
        %vm2464 = vcmp.eq.f32.partialorder %v2454, inf
        %v2465 = vsel %vm2464, %v2454, %v2463
        %vm2466 = vcmp.eq.f32.partialorder %v2454, 0.0
        %v2467 = vand.u32 %v2454, 2147483648
        %v2468 = vsel %vm2466, %v2467, %v2465
        %v2469 = vadd.f32 %v2461, 1.1920929e-07
        %v2470 = vadd.f32 %v2468, 1.1920929e-07
        %v2471 = vrcp.pop %v2469
        %v2472 = vmul.f32 %v2443, %v2471
        %v2473 = vrcp.pop %v2470
        %v2474 = vmul.f32 %v2446, %v2473
        %v2475 = vld [vmem:[%s10] sm:$0x1]
        %v2476 = vmul.f32 %v2475, 0.56568545
        %v2477 = vand.u32 2147483647, %v2476
        %v2478 = vsub.f32 %v2472, %v1809
        %v2479 = vsub.f32 %v2474, %v1811
        %v2481 = vlaneseq
        %v2482 = vshrl.u32 %v2481, 7
        %v2483 = vsub.s32 0, %v2482
        %v2484 = vrot.slane %v2477, %v2483
        %v2486 = vmul.f32 %v2484, %v2478
        %v2487 = vmul.f32 %v2484, %v2479
        %v2488 = vadd.f32 %v1809, %v2486
        %v2489 = vadd.f32 %v1811, %v2487
        %v2490 = vmul.f32 %v2488, %v2488
        %v2491 = vmul.f32 %v2489, %v2489
        %2492 = vadd.xlane.f32.xlu0 %v2490
        %v2493 = vpop.xlane.xlu0 %2492
        %2494 = vadd.xlane.f32.xlu0 %v2491
        %v2495 = vpop.xlane.xlu0 %2494
        %v2496 = vrsqrt.pop %v2493
        %v2497 = vmul.f32 %v2493, %v2496
        %vm2498 = vcmp.eq.f32.partialorder %v2493, inf
        %v2499 = vsel %vm2498, %v2493, %v2497
        %vm2500 = vcmp.eq.f32.partialorder %v2493, 0.0
        %v2501 = vand.u32 %v2493, 2147483648
        %v2502 = vsel %vm2500, %v2501, %v2499
        %v2503 = vrsqrt.pop %v2495
        %v2504 = vmul.f32 %v2495, %v2503
        %vm2505 = vcmp.eq.f32.partialorder %v2495, inf
        %v2506 = vsel %vm2505, %v2495, %v2504
        %vm2507 = vcmp.eq.f32.partialorder %v2495, 0.0
        %v2508 = vand.u32 %v2495, 2147483648
        %v2509 = vsel %vm2507, %v2508, %v2506
        %v2510 = vadd.f32 %v2502, 1.1920929e-07
        %v2511 = vadd.f32 %v2509, 1.1920929e-07
        %v2512 = vrcp.pop %v2510
        %v2513 = vmul.f32 %v2488, %v2512
        %v2514 = vrcp.pop %v2511
        %v2515 = vmul.f32 %v2489, %v2514
        %2516 = vst [vmem:[%s564] sm:$0xff] %v2513
        %2517 = vst [vmem:[%s564 + $0x8] sm:$0xff] %v2515
        %s2518 = sand.u32 %s289, 1
        %s2519 = scalar_lea.sflag [#allocation4], %s2518
        %s2520 = sand.u32 %s289, 1
        %s2521 = smul.addr %s2520, 16
        %s2522 = scalar_lea.vmem [#allocation18], %s2521
        // Predicated region
        $region101: #{tpu_custom_call.1} parent=63 // pred_check
          %p2523 = pneg %p299
        $region102: #{tpu_custom_call.1} parent=63 // pred_check_branch
          %2525 = sbr.rel (%p2523) target = $region104
        $region103: #{tpu_custom_call.1} parent=63 // pred_region
          %s2527 = ssub.s32 256, 256
          %2528 = vsyncadd %s2519, %s2527
          %s2529 = smul.addr %s35, 2
          %s2530 = smul.addr %s2529, 128
          %s2531 = scalar_lea.hbm %s11, %s2530
          %s2532 = sshll.u32 %s2522, 4
          %s2533 = int_to_ptr.vmem [resolvable:$true] %s2532
          %2538 = dma.vmem_to_hbm [thread:$0]  %s2533, 256, %s2531, %s2519, 128, 128, 8
        $region104: #{tpu_custom_call.1} parent=63 // pred_fallthru
          _
      $region64: #{tpu_custom_call.1} parent=5 // pred_fallthru
        _
      %p2539 = scmp.le.s32.totalorder 2, %s30
      // Predicated region
      $region105: #{tpu_custom_call.1} parent=5 // pred_check
        %p2540 = pneg %p2539
      $region106: #{tpu_custom_call.1} parent=5 // pred_check_branch
        %2542 = sbr.rel (%p2540) target = $region108
      $region107: #{tpu_custom_call.1} parent=5 // pred_region
        %s2543 = ssub.s32 %s30, 2
        // Predicated region
        $region109: #{tpu_custom_call.1} parent=107 // pred_check
          %p2544 = pneg %p305
        $region110: #{tpu_custom_call.1} parent=107 // pred_check_branch
          %2546 = sbr.rel (%p2544) target = $region112
        $region111: #{tpu_custom_call.1} parent=107 // pred_region
          %s2547 = sand.u32 %s290, 1
          %s2548 = scalar_lea.sflag [#allocation4], %s2547
          %s2549 = sand.u32 %s290, 1
          %s2550 = smul.addr %s2549, 16
          %s2551 = scalar_lea.vmem [#allocation18], %s2550
          %2552 = dma.done %s2548, 256
        $region112: #{tpu_custom_call.1} parent=107 // pred_fallthru
          _
      $region108: #{tpu_custom_call.1} parent=5 // pred_fallthru
        _
    $region6: #{tpu_custom_call.1} parent=1 // loop_footer
      %s34 = sadd.s32 1, %s30
    $region7: #{tpu_custom_call.1} parent=1 // loop_footer_branch
      %29 = sbr.rel target = $region3
    $region8: #{tpu_custom_call.1} parent=1 // loop_exit
      _
    %2553 = vsyncpa [#allocation3], 1
    %s2554 = scalar_lea.sflag [#allocation3], 1
    %2555 = vsyncpa %s2554, 1
    %2556 = vsyncpa [#allocation10], 1
    %s2557 = scalar_lea.sflag [#allocation10], 1
    %2558 = vsyncpa %s2557, 1
    %2559 = vsyncpa [#allocation13], 1
    %2560 = vsyncpa [#allocation16], 1
    %2561 = vsyncpa [#allocation4], 1
    %s2562 = scalar_lea.sflag [#allocation4], 1
    %2563 = vsyncpa %s2562, 1
    %2564 = vsyncpa [#allocation5], 1
    %s2565 = scalar_lea.sflag [#allocation5], 1
    %2566 = vsyncpa %s2565, 1
    %2567 = vsyncpa [#allocation6], 1
    %s2568 = scalar_lea.sflag [#allocation6], 1
    %2569 = vsyncpa %s2568, 1

</llo_original>
